<compile_context>
chip_gen: v6e
topology: v6e:2x2x1
jax: 0.10.0
libtpu: 0.0.40
codegen_flags: <defaults>
</compile_context>

<pallas_src>
import numpy as np
import jax
import jax.numpy as jnp
from jax import lax
from jax.experimental import pallas as pl
from jax.experimental.pallas import tpu as pltpu

EPS = 1e-6
NEG = -1e30            # "minus infinity" that stays finite (no inf-inf -> NaN)
LANE = 128             # TPU lane width; class axis is padded to a multiple of this


def _round_up(x, m):
    return (x + m - 1) // m * m


# ----------------------------------------------------------------------------
# Fused D3PM forward kernel factory (one grid step per batch-block of Bb rows)
# ----------------------------------------------------------------------------
def _make_d3pm_kernel(num_classes: int):
    C = num_classes
    # compile-time constants (review item: selects instead of log(one_hot+eps))
    LOG_EPS = float(np.log(EPS))
    LOG_1PEPS = float(np.log1p(EPS))
    SM_HI = float((1.0 + EPS) / (1.0 + C * EPS))   # softmax(log(onehot+eps)) @ target
    SM_LO = float(EPS / (1.0 + C * EPS))           # softmax(log(onehot+eps)) elsewhere

    def kernel(x_ref,       # (Bb, S, 1)   int32 tokens x_0
               g_ref,       # (Bb, S, CP)  f32  gumbel noise, padded lanes = NEG
               bias_ref,    # (Bb, 1, H)   f32  temb[t] + cond
               first_ref,   # (Bb, 1, 1)   f32  1.0 where t == 1
               w1_ref,      # (CP, H)      bf16 (zero-padded rows >= C)
               w2_ref,      # (H, CP)      bf16 (zero-padded cols >= C)
               qm1_ref,     # (Bb, CP, CP) bf16 q_mats[t-1]
               qost_ref,    # (Bb, CP, CP) bf16 q_one_step_transposed[t-1]
               qm2_ref,     # (Bb, CP, CP) bf16 q_mats[t-2] (wrapped for t==1)
               pred_ref,    # out (Bb, S, CP) f32: lanes[0:C]=pred logits, lane C = x_t
               loss_ref):   # out (Bb, 1, 128) f32: lane0 = vb_b, lane1 = ce_b
        Bb, S, CP = g_ref.shape
        H = w1_ref.shape[1]

        cls = lax.broadcasted_iota(jnp.int32, (Bb, S, CP), 2)    # class id per lane
        valid = cls < C                                          # real-class mask

        # ---- one-hot(x_0) built in-kernel from int tokens (padded lanes are 0) ----
        x0_oh = (cls == x_ref[...]).astype(jnp.float32)          # (Bb, S, CP)
        x0_oh_b = x0_oh.astype(jnp.bfloat16)

        # ---- q_sample: x_t = argmax(log(q_mats[t-1, x0, :] + eps) + gumbel) -------
        probs = jnp.einsum("bsc,bcd->bsd", x0_oh_b, qm1_ref[...],
                           preferred_element_type=jnp.float32)   # f32 accumulate
        vals = jnp.log(probs + EPS) + g_ref[...]                 # padded lanes ~ NEG
        m = jnp.max(vals, axis=-1, keepdims=True)
        am = jnp.min(jnp.where(vals == m, cls, CP),              # first-max index (f32 cmp)
                     axis=-1, keepdims=True)                     # (Bb, S, 1) int32
        xt_oh = (cls == am).astype(jnp.bfloat16)

        # ---- x0_model: relu(onehot(x0) @ W1 + (temb[t] + cond)) @ W2 ---------------
        h = jnp.dot(x0_oh_b.reshape(Bb * S, CP), w1_ref[...],
                    preferred_element_type=jnp.float32).reshape(Bb, S, H)
        h = jnp.maximum(h + bias_ref[...], 0.0)
        pred = jnp.dot(h.reshape(Bb * S, H).astype(jnp.bfloat16), w2_ref[...],
                       preferred_element_type=jnp.float32).reshape(Bb, S, CP)
        pred_m = jnp.where(valid, pred, NEG)                     # mask padded classes

        # ---- q_posterior_logits (true & pred) --------------------------------------
        fact1 = jnp.einsum("bsc,bcd->bsd", xt_oh, qost_ref[...],
                           preferred_element_type=jnp.float32)
        log_fact1 = jnp.log(fact1 + EPS)

        # softmax(log(onehot+eps)) == two constants; padded lanes hit zero rows of qm2
        sm_true = jnp.where(x0_oh > 0, SM_HI, SM_LO).astype(jnp.bfloat16)
        fact2_true = jnp.einsum("bsc,bcd->bsd", sm_true, qm2_ref[...],
                                preferred_element_type=jnp.float32)

        # softmax(pred) and log_softmax(pred) share one max/exp/sum pass
        mp = jnp.max(pred_m, axis=-1, keepdims=True)
        ep = jnp.exp(pred_m - mp)                                # padded lanes -> 0
        sp = jnp.sum(ep, axis=-1, keepdims=True)
        sm_pred = ep / sp
        lsm_pred = (pred_m - mp) - jnp.log(sp)                   # reused for CE
        fact2_pred = jnp.einsum("bsc,bcd->bsd", sm_pred.astype(jnp.bfloat16),
                                qm2_ref[...], preferred_element_type=jnp.float32)

        out_true = log_fact1 + jnp.log(fact2_true + EPS)
        out_pred = log_fact1 + jnp.log(fact2_pred + EPS)

        x0_logits_true = jnp.where(x0_oh > 0, LOG_1PEPS, LOG_EPS)  # log(onehot+eps)

        first = first_ref[...] > 0.0                              # (Bb,1,1) -> broadcast
        dist1 = jnp.where(valid, jnp.where(first, x0_logits_true, out_true), NEG)
        dist2 = jnp.where(valid, jnp.where(first, pred_m, out_pred), NEG)

        # shared softmax / log_softmax on dist1 (the +eps shift inside torch's softmax
        # is shift-invariant and dropped)
        m1 = jnp.max(dist1, axis=-1, keepdims=True)
        e1 = jnp.exp(dist1 - m1)
        s1 = jnp.sum(e1, axis=-1, keepdims=True)
        sm1 = e1 / s1
        lsm1 = (dist1 - m1) - jnp.log(s1)

        m2 = jnp.max(dist2, axis=-1, keepdims=True)
        e2 = jnp.exp(dist2 - m2)
        s2 = jnp.sum(e2, axis=-1, keepdims=True)
        lsm2 = (dist2 - m2) - jnp.log(s2)

        vb = sm1 * (lsm1 - lsm2)                                  # padded lanes: 0 * 0
        ce = -(x0_oh * lsm_pred)
        vb_b = jnp.sum(jnp.sum(vb, axis=2, keepdims=True), axis=1, keepdims=True)  # (Bb,1,1)
        ce_b = jnp.sum(jnp.sum(ce, axis=2, keepdims=True), axis=1, keepdims=True)

        # ---- lane-dense stores ------------------------------------------------------
        # one full 128-lane slab: lanes [0,C) = pred logits, lane C = x_t (exact int in f32)
        pred_ref[...] = jnp.where(cls == C, am.astype(jnp.float32), pred)

        lane = lax.broadcasted_iota(jnp.int32, loss_ref.shape, 2)
        loss_ref[...] = jnp.where(lane == 0, vb_b, jnp.where(lane == 1, ce_b, 0.0))

    return kernel


# ----------------------------------------------------------------------------
# wrapper: one fused pallas_call for the whole forward pass
# ----------------------------------------------------------------------------
def d3pm_forward(x, cond, t, noise, params, q_ost_T, q_mats, n_T, num_classes,
                 hybrid_loss_coeff=0.001, batch_block=None):
    B, S = x.shape
    C = num_classes
    H = params["W1"].shape[1]
    CP = max(LANE, _round_up(C + 1, LANE))       # +1: lane C carries x_t in the output slab

    if batch_block is None:
        # as many (b, s) rows per grid step as possible while keeping >= 2 grid
        # steps so v7x's two TensorCores both get work via the "parallel" axis.
        batch_block = max(1, B // 2)
    Bb = batch_block
    assert B % Bb == 0
    n_steps = B // Bb

    # ---- cheap XLA-side prep (gathers / pads / casts) -------------------------------
    x3 = x[:, :, None].astype(jnp.int32)                                     # (B,S,1)

    # Gumbel transform precomputed outside the kernel; padded lanes get NEG so they
    # can never win the in-kernel argmax.
    g = -jnp.log(-jnp.log(jnp.clip(noise.astype(jnp.float32), EPS, 1.0 - EPS)))
    g = jnp.pad(g, ((0, 0), (0, 0), (0, CP - C)), constant_values=NEG)       # (B,S,CP)

    bias3 = (params["temb"][t] + cond)[:, None, :].astype(jnp.float32)       # (B,1,H)
    first = (t == 1).astype(jnp.float32)[:, None, None]                      # (B,1,1)

    # per-t transition-matrix slices gathered outside (VMEM constant in n_T),
    # zero-padded to the 128-lane class grid and fed to the MXU as bf16.
    def pad_cc(a):
        return jnp.pad(a, ((0, 0), (0, CP - C), (0, CP - C))).astype(jnp.bfloat16)

    qm1_b = pad_cc(q_mats[t - 1])                                            # q_mats[t-1]
    qost_b = pad_cc(q_ost_T[t - 1])                                          # q_one_step_T[t-1]
    qm2_b = pad_cc(q_mats[jnp.where(t == 1, n_T - 1, t - 2)])                # torch q_mats[-1] wrap
    w1p = jnp.pad(params["W1"], ((0, CP - C), (0, 0))).astype(jnp.bfloat16)  # (CP,H)
    w2p = jnp.pad(params["W2"], ((0, 0), (0, CP - C))).astype(jnp.bfloat16)  # (H,CP)

    kernel = _make_d3pm_kernel(C)

    gs = pltpu.PrefetchScalarGridSpec(
        num_scalar_prefetch=0,
        grid=(n_steps,),
        in_specs=[
            pl.BlockSpec((Bb, S, 1), lambda b: (b, 0, 0)),       # x_0 tokens
            pl.BlockSpec((Bb, S, CP), lambda b: (b, 0, 0)),      # gumbel noise (padded)
            pl.BlockSpec((Bb, 1, H), lambda b: (b, 0, 0)),       # temb[t] + cond
            pl.BlockSpec((Bb, 1, 1), lambda b: (b, 0, 0)),       # (t == 1) mask
            pl.BlockSpec((CP, H), lambda b: (0, 0)),             # W1 (constant)
            pl.BlockSpec((H, CP), lambda b: (0, 0)),             # W2 (constant)
            pl.BlockSpec((Bb, CP, CP), lambda b: (b, 0, 0)),     # q_mats[t-1]
            pl.BlockSpec((Bb, CP, CP), lambda b: (b, 0, 0)),     # q_one_step_T[t-1]
            pl.BlockSpec((Bb, CP, CP), lambda b: (b, 0, 0)),     # q_mats[t-2]
        ],
        out_specs=[
            pl.BlockSpec((Bb, S, CP), lambda b: (b, 0, 0)),      # pred(+x_t) slab
            pl.BlockSpec((Bb, 1, LANE), lambda b: (b, 0, 0)),    # [vb, ce] partials
        ],
    )

    pred_slab, losses = pl.pallas_call(
        kernel,
        out_shape=(jax.ShapeDtypeStruct((B, S, CP), jnp.float32),
                   jax.ShapeDtypeStruct((B, 1, LANE), jnp.float32)),
        grid_spec=gs,
        compiler_params=pltpu.CompilerParams(dimension_semantics=("parallel",)),
    )(x3, g, bias3, first, w1p, w2p, qm1_b, qost_b, qm2_b)

    pred = pred_slab[:, :, :C]                                   # (B,S,C) predicted x0 logits
    x_t = pred_slab[:, :, C].astype(jnp.int32)                   # (B,S) forward-diffused sample
    N = B * S
    vb_loss = jnp.sum(losses[:, 0, 0]) / N
    ce_loss = jnp.sum(losses[:, 0, 1]) / N
    loss = vb_loss * hybrid_loss_coeff + ce_loss
    return loss, vb_loss, ce_loss, x_t, pred


# ----------------------------------------------------------------------------
# parameter / buffer setup (plain numpy/JAX glue)
# ----------------------------------------------------------------------------
def build_transition_matrices(n_T, num_classes):
    beta_t = [1.0 / (n_T - t + 1) for t in range(1, n_T + 1)]
    mats = []
    for beta in beta_t:
        m = np.full((num_classes, num_classes), beta / num_classes, dtype=np.float64)
        np.fill_diagonal(m, 1.0 - (num_classes - 1) * beta / num_classes)
        mats.append(m)
    q_one_step = np.stack(mats, axis=0)                          # (n_T, C, C)
    q_ost_T = np.transpose(q_one_step, (0, 2, 1))
    qm = [q_one_step[0]]
    for i in range(1, n_T):
        qm.append(qm[-1] @ q_one_step[i])
    q_mats = np.stack(qm, axis=0)
    return (jnp.asarray(q_ost_T, jnp.float32),
            jnp.asarray(q_mats, jnp.float32))


# ----------------------------------------------------------------------------
# pure-JAX reference (same math as torch, for verification)
# ----------------------------------------------------------------------------
def reference_loss(x, x_t, pred, t, q_ost_T, q_mats, n_T, num_classes,
                   hybrid_loss_coeff=0.001):
    x_oh = jax.nn.one_hot(x, num_classes, dtype=jnp.float32)
    xt_oh = jax.nn.one_hot(x_t, num_classes, dtype=jnp.float32)

    def q_posterior(x0_logits):
        fact1 = jnp.einsum("bsc,bcd->bsd", xt_oh, q_ost_T[t - 1])
        sm = jax.nn.softmax(x0_logits, axis=-1)
        qm2 = q_mats[jnp.where(t == 1, n_T - 1, t - 2)]
        fact2 = jnp.einsum("bsc,bcd->bsd", sm, qm2)
        out = jnp.log(fact1 + EPS) + jnp.log(fact2 + EPS)
        return jnp.where((t == 1)[:, None, None], x0_logits, out)

    true_post = q_posterior(jnp.log(x_oh + EPS))
    pred_post = q_posterior(pred)
    vb = (jax.nn.softmax(true_post + EPS, -1)
          * (jax.nn.log_softmax(true_post + EPS, -1)
             - jax.nn.log_softmax(pred_post + EPS, -1))).sum(-1).mean()
    ce = -jnp.mean(jnp.sum(x_oh * jax.nn.log_softmax(pred, -1), -1))
    return vb * hybrid_loss_coeff + ce, vb, ce


# ----------------------------------------------------------------------------
if __name__ == "__main__":
    B, S = 2, 8            # batch, sequence of discrete tokens
    num_classes = 10
    n_T = 8
    H = 32                 # hidden width of the synthetic x0_model

    q_ost_T, q_mats = build_transition_matrices(n_T, num_classes)

    key = jax.random.PRNGKey(0)
    kx, kc, kt, kn, kw1, kw2, kte = jax.random.split(key, 7)
    x = jax.random.randint(kx, (B, S), 0, num_classes, dtype=jnp.int32)
    cond = jax.random.normal(kc, (B, H), dtype=jnp.float32)
    # TODO(synk): torch samples t / noise inside forward(); mirrored deterministically here.
    t = jax.random.randint(kt, (B,), 1, n_T, dtype=jnp.int32)     # torch.randint(1, n_T)
    noise = jax.random.uniform(kn, (B, S, num_classes), dtype=jnp.float32)

    params = {
        "W1": 0.1 * jax.random.normal(kw1, (num_classes, H), dtype=jnp.float32),
        "W2": 0.1 * jax.random.normal(kw2, (H, num_classes), dtype=jnp.float32),
        "temb": 0.1 * jax.random.normal(kte, (n_T, H), dtype=jnp.float32),
    }

    loss, vb_loss, ce_loss, x_t, pred = d3pm_forward(
        x, cond, t, noise, params, q_ost_T, q_mats, n_T, num_classes)
    jax.block_until_ready(loss)

    # --- verify the x0-model part against a plain-JAX reference (f32) ---
    x_oh_ref = jax.nn.one_hot(x, num_classes, dtype=jnp.float32)
    h_ref = jnp.maximum(
        jnp.einsum("bsc,ch->bsh", x_oh_ref, params["W1"])
        + params["temb"][t][:, None, :] + cond[:, None, :], 0.0)
    pred_ref = jnp.einsum("bsh,hc->bsc", h_ref, params["W2"])
    np.testing.assert_allclose(np.asarray(pred), np.asarray(pred_ref),
                               rtol=1e-2, atol=1e-2)

    # --- verify the loss against a plain-JAX reference (uses the kernel's own
    #     x_t / pred so the comparison is insensitive to argmax tie-breaking
    #     and MXU/bf16 rounding of the sampling path) ---
    ref_loss, ref_vb, ref_ce = reference_loss(
        x, x_t, pred, t, q_ost_T, q_mats, n_T, num_classes)
    np.testing.assert_allclose(np.asarray(vb_loss), np.asarray(ref_vb),
                               rtol=1e-2, atol=1e-2)
    np.testing.assert_allclose(np.asarray(ce_loss), np.asarray(ref_ce),
                               rtol=1e-2, atol=1e-2)
    np.testing.assert_allclose(np.asarray(loss), np.asarray(ref_loss),
                               rtol=1e-2, atol=1e-2)

    assert x_t.shape == x.shape
    assert x_t.dtype == jnp.int32
    assert int(jnp.min(x_t)) >= 0 and int(jnp.max(x_t)) < num_classes

    print("KERNEL_OK")
</pallas_src>

<mosaic_0001>
module attributes {stable_mosaic.version = 11 : i64} {
  func.func @kernel(%arg0: i32, %arg1: memref<1x8x1xi32, #tpu.memory_space<vmem>>, %arg2: memref<1x8x128xf32, #tpu.memory_space<vmem>>, %arg3: memref<1x1x32xf32, #tpu.memory_space<vmem>>, %arg4: memref<1x1x1xf32, #tpu.memory_space<vmem>>, %arg5: memref<128x32xbf16, #tpu.memory_space<vmem>>, %arg6: memref<32x128xbf16, #tpu.memory_space<vmem>>, %arg7: memref<1x128x128xbf16, #tpu.memory_space<vmem>>, %arg8: memref<1x128x128xbf16, #tpu.memory_space<vmem>>, %arg9: memref<1x128x128xbf16, #tpu.memory_space<vmem>>, %arg10: memref<1x8x128xf32, #tpu.memory_space<vmem>>, %arg11: memref<1x1x128xf32, #tpu.memory_space<vmem>>) attributes {dimension_semantics = [#tpu.dimension_semantics<parallel>], iteration_bounds = array<i64: 2>, scalar_prefetch = 0 : i64, scratch_operands = 0 : i64, tpu.core_type = #tpu.core_type<tc>, window_params = [{transform_indices = @transform_0, window_bounds = array<i64: 1, 8, 1>}, {transform_indices = @transform_1, window_bounds = array<i64: 1, 8, 128>}, {transform_indices = @transform_2, window_bounds = array<i64: 1, 1, 32>}, {transform_indices = @transform_3, window_bounds = array<i64: 1, 1, 1>}, {pipeline_mode = #tpu.pipeline_mode<synchronous>, transform_indices = @transform_4, window_bounds = array<i64: 128, 32>}, {pipeline_mode = #tpu.pipeline_mode<synchronous>, transform_indices = @transform_5, window_bounds = array<i64: 32, 128>}, {transform_indices = @transform_6, window_bounds = array<i64: 1, 128, 128>}, {transform_indices = @transform_7, window_bounds = array<i64: 1, 128, 128>}, {transform_indices = @transform_8, window_bounds = array<i64: 1, 128, 128>}, {transform_indices = @transform_9, window_bounds = array<i64: 1, 8, 128>}, {transform_indices = @transform_10, window_bounds = array<i64: 1, 1, 128>}]} {
    %0 = tpu.iota {dimensions = array<i32: 2>} : vector<1x8x128xi32>
    %c10_i32 = arith.constant 10 : i32
    %1 = vector.broadcast %c10_i32 : i32 to vector<1x8x128xi32>
    %2 = arith.cmpi slt, %0, %1 : vector<1x8x128xi32>
    %c0 = arith.constant 0 : index
    %c0_0 = arith.constant 0 : index
    %c0_1 = arith.constant 0 : index
    %3 = vector.load %arg1[%c0, %c0_0, %c0_1] : memref<1x8x1xi32, #tpu.memory_space<vmem>>, vector<1x8x1xi32>
    %4 = vector.broadcast %3 : vector<1x8x1xi32> to vector<1x8x128xi32>
    %5 = arith.cmpi eq, %0, %4 : vector<1x8x128xi32>
    %6 = arith.extui %5 : vector<1x8x128xi1> to vector<1x8x128xi32>
    %7 = arith.sitofp %6 : vector<1x8x128xi32> to vector<1x8x128xf32>
    %8 = arith.truncf %7 : vector<1x8x128xf32> to vector<1x8x128xbf16>
    %c0_2 = arith.constant 0 : index
    %c0_3 = arith.constant 0 : index
    %c0_4 = arith.constant 0 : index
    %9 = vector.load %arg7[%c0_2, %c0_3, %c0_4] : memref<1x128x128xbf16, #tpu.memory_space<vmem>>, vector<1x128x128xbf16>
    "tpu.trace_start"() <{level = 10 : i32, message = "bsc,bcd->bsd"}> : () -> ()
    %cst = arith.constant dense<0.000000e+00> : vector<1x8x128xf32>
    %10 = tpu.matmul %8, %9, %cst {dimension_numbers = #tpu.dot_dimension_numbers<[2], [1], [1], [2], [0, 0, 0, 1, 1, 2], [0], [0]>} : vector<1x8x128xbf16>, vector<1x128x128xbf16>, vector<1x8x128xf32> -> vector<1x8x128xf32>
    "tpu.trace_stop"() : () -> ()
    %cst_5 = arith.constant 9.99999997E-7 : f32
    %11 = vector.broadcast %cst_5 : f32 to vector<1x8x128xf32>
    %12 = arith.addf %10, %11 : vector<1x8x128xf32>
    %13 = math.log %12 : vector<1x8x128xf32>
    %c0_6 = arith.constant 0 : index
    %c0_7 = arith.constant 0 : index
    %c0_8 = arith.constant 0 : index
    %14 = vector.load %arg2[%c0_6, %c0_7, %c0_8] : memref<1x8x128xf32, #tpu.memory_space<vmem>>, vector<1x8x128xf32>
    %15 = arith.addf %13, %14 : vector<1x8x128xf32>
    %cst_9 = arith.constant dense<0xFF800000> : vector<1x8xf32>
    %16 = vector.multi_reduction <maximumf>, %15, %cst_9 [2] : vector<1x8x128xf32> to vector<1x8xf32>
    %17 = vector.shape_cast %16 : vector<1x8xf32> to vector<1x8x1xf32>
    %18 = vector.broadcast %17 : vector<1x8x1xf32> to vector<1x8x128xf32>
    %19 = arith.cmpf oeq, %15, %18 : vector<1x8x128xf32>
    %c128_i32 = arith.constant 128 : i32
    %20 = vector.broadcast %c128_i32 : i32 to vector<1x8x128xi32>
    %21 = arith.select %19, %0, %20 : vector<1x8x128xi1>, vector<1x8x128xi32>
    %cst_10 = arith.constant dense<2147483647> : vector<1x8xi32>
    %22 = vector.multi_reduction <minsi>, %21, %cst_10 [2] : vector<1x8x128xi32> to vector<1x8xi32>
    %23 = vector.shape_cast %22 : vector<1x8xi32> to vector<1x8x1xi32>
    %24 = vector.broadcast %23 : vector<1x8x1xi32> to vector<1x8x128xi32>
    %25 = arith.cmpi eq, %0, %24 : vector<1x8x128xi32>
    %26 = arith.extui %25 : vector<1x8x128xi1> to vector<1x8x128xi32>
    %27 = arith.sitofp %26 : vector<1x8x128xi32> to vector<1x8x128xf32>
    %28 = arith.truncf %27 : vector<1x8x128xf32> to vector<1x8x128xbf16>
    %29 = vector.shape_cast %8 : vector<1x8x128xbf16> to vector<8x128xbf16>
    %c0_11 = arith.constant 0 : index
    %c0_12 = arith.constant 0 : index
    %30 = vector.load %arg5[%c0_11, %c0_12] : memref<128x32xbf16, #tpu.memory_space<vmem>>, vector<128x32xbf16>
    %cst_13 = arith.constant dense<0.000000e+00> : vector<8x32xf32>
    %31 = tpu.matmul %29, %30, %cst_13 {dimension_numbers = #tpu.dot_dimension_numbers<[1], [0], [0], [1], [0, 0, 1, 1], [], []>} : vector<8x128xbf16>, vector<128x32xbf16>, vector<8x32xf32> -> vector<8x32xf32>
    %32 = vector.shape_cast %31 : vector<8x32xf32> to vector<1x8x32xf32>
    %c0_14 = arith.constant 0 : index
    %c0_15 = arith.constant 0 : index
    %c0_16 = arith.constant 0 : index
    %33 = vector.load %arg3[%c0_14, %c0_15, %c0_16] : memref<1x1x32xf32, #tpu.memory_space<vmem>>, vector<1x1x32xf32>
    %34 = vector.broadcast %33 : vector<1x1x32xf32> to vector<1x8x32xf32>
    %35 = arith.addf %32, %34 : vector<1x8x32xf32>
    %cst_17 = arith.constant 0.000000e+00 : f32
    %36 = vector.broadcast %cst_17 : f32 to vector<1x8x32xf32>
    %37 = arith.maximumf %35, %36 : vector<1x8x32xf32>
    %38 = vector.shape_cast %37 : vector<1x8x32xf32> to vector<8x32xf32>
    %39 = arith.truncf %38 : vector<8x32xf32> to vector<8x32xbf16>
    %c0_18 = arith.constant 0 : index
    %c0_19 = arith.constant 0 : index
    %40 = vector.load %arg6[%c0_18, %c0_19] : memref<32x128xbf16, #tpu.memory_space<vmem>>, vector<32x128xbf16>
    %cst_20 = arith.constant dense<0.000000e+00> : vector<8x128xf32>
    %41 = tpu.matmul %39, %40, %cst_20 {dimension_numbers = #tpu.dot_dimension_numbers<[1], [0], [0], [1], [0, 0, 1, 1], [], []>} : vector<8x32xbf16>, vector<32x128xbf16>, vector<8x128xf32> -> vector<8x128xf32>
    %42 = vector.shape_cast %41 : vector<8x128xf32> to vector<1x8x128xf32>
    %cst_21 = arith.constant -1.000000e+30 : f32
    %43 = vector.broadcast %cst_21 : f32 to vector<1x8x128xf32>
    %44 = arith.select %2, %42, %43 : vector<1x8x128xi1>, vector<1x8x128xf32>
    %c0_22 = arith.constant 0 : index
    %c0_23 = arith.constant 0 : index
    %c0_24 = arith.constant 0 : index
    %45 = vector.load %arg8[%c0_22, %c0_23, %c0_24] : memref<1x128x128xbf16, #tpu.memory_space<vmem>>, vector<1x128x128xbf16>
    "tpu.trace_start"() <{level = 10 : i32, message = "bsc,bcd->bsd"}> : () -> ()
    %cst_25 = arith.constant dense<0.000000e+00> : vector<1x8x128xf32>
    %46 = tpu.matmul %28, %45, %cst_25 {dimension_numbers = #tpu.dot_dimension_numbers<[2], [1], [1], [2], [0, 0, 0, 1, 1, 2], [0], [0]>} : vector<1x8x128xbf16>, vector<1x128x128xbf16>, vector<1x8x128xf32> -> vector<1x8x128xf32>
    "tpu.trace_stop"() : () -> ()
    %cst_26 = arith.constant 9.99999997E-7 : f32
    %47 = vector.broadcast %cst_26 : f32 to vector<1x8x128xf32>
    %48 = arith.addf %46, %47 : vector<1x8x128xf32>
    %49 = math.log %48 : vector<1x8x128xf32>
    %cst_27 = arith.constant 0.000000e+00 : f32
    %50 = vector.broadcast %cst_27 : f32 to vector<1x8x128xf32>
    %51 = arith.cmpf ogt, %7, %50 : vector<1x8x128xf32>
    %cst_28 = arith.constant 0.999990999 : f32
    %cst_29 = arith.constant 9.99989993E-7 : f32
    %52 = vector.broadcast %cst_28 : f32 to vector<1x8x128xf32>
    %53 = vector.broadcast %cst_29 : f32 to vector<1x8x128xf32>
    %54 = arith.select %51, %52, %53 : vector<1x8x128xi1>, vector<1x8x128xf32>
    %55 = arith.truncf %54 : vector<1x8x128xf32> to vector<1x8x128xbf16>
    %c0_30 = arith.constant 0 : index
    %c0_31 = arith.constant 0 : index
    %c0_32 = arith.constant 0 : index
    %56 = vector.load %arg9[%c0_30, %c0_31, %c0_32] : memref<1x128x128xbf16, #tpu.memory_space<vmem>>, vector<1x128x128xbf16>
    "tpu.trace_start"() <{level = 10 : i32, message = "bsc,bcd->bsd"}> : () -> ()
    %cst_33 = arith.constant dense<0.000000e+00> : vector<1x8x128xf32>
    %57 = tpu.matmul %55, %56, %cst_33 {dimension_numbers = #tpu.dot_dimension_numbers<[2], [1], [1], [2], [0, 0, 0, 1, 1, 2], [0], [0]>} : vector<1x8x128xbf16>, vector<1x128x128xbf16>, vector<1x8x128xf32> -> vector<1x8x128xf32>
    "tpu.trace_stop"() : () -> ()
    %cst_34 = arith.constant dense<0xFF800000> : vector<1x8xf32>
    %58 = vector.multi_reduction <maximumf>, %44, %cst_34 [2] : vector<1x8x128xf32> to vector<1x8xf32>
    %59 = vector.shape_cast %58 : vector<1x8xf32> to vector<1x8x1xf32>
    %60 = vector.broadcast %59 : vector<1x8x1xf32> to vector<1x8x128xf32>
    %61 = arith.subf %44, %60 : vector<1x8x128xf32>
    %62 = math.exp %61 : vector<1x8x128xf32>
    %cst_35 = arith.constant dense<0.000000e+00> : vector<1x8xf32>
    %63 = vector.multi_reduction <add>, %62, %cst_35 [2] : vector<1x8x128xf32> to vector<1x8xf32>
    %64 = vector.shape_cast %63 : vector<1x8xf32> to vector<1x8x1xf32>
    %65 = vector.broadcast %64 : vector<1x8x1xf32> to vector<1x8x128xf32>
    %66 = arith.divf %62, %65 : vector<1x8x128xf32>
    %67 = vector.broadcast %59 : vector<1x8x1xf32> to vector<1x8x128xf32>
    %68 = arith.subf %44, %67 : vector<1x8x128xf32>
    %69 = math.log %64 : vector<1x8x1xf32>
    %70 = vector.broadcast %69 : vector<1x8x1xf32> to vector<1x8x128xf32>
    %71 = arith.subf %68, %70 : vector<1x8x128xf32>
    %72 = arith.truncf %66 : vector<1x8x128xf32> to vector<1x8x128xbf16>
    %c0_36 = arith.constant 0 : index
    %c0_37 = arith.constant 0 : index
    %c0_38 = arith.constant 0 : index
    %73 = vector.load %arg9[%c0_36, %c0_37, %c0_38] : memref<1x128x128xbf16, #tpu.memory_space<vmem>>, vector<1x128x128xbf16>
    "tpu.trace_start"() <{level = 10 : i32, message = "bsc,bcd->bsd"}> : () -> ()
    %cst_39 = arith.constant dense<0.000000e+00> : vector<1x8x128xf32>
    %74 = tpu.matmul %72, %73, %cst_39 {dimension_numbers = #tpu.dot_dimension_numbers<[2], [1], [1], [2], [0, 0, 0, 1, 1, 2], [0], [0]>} : vector<1x8x128xbf16>, vector<1x128x128xbf16>, vector<1x8x128xf32> -> vector<1x8x128xf32>
    "tpu.trace_stop"() : () -> ()
    %cst_40 = arith.constant 9.99999997E-7 : f32
    %75 = vector.broadcast %cst_40 : f32 to vector<1x8x128xf32>
    %76 = arith.addf %57, %75 : vector<1x8x128xf32>
    %77 = math.log %76 : vector<1x8x128xf32>
    %78 = arith.addf %49, %77 : vector<1x8x128xf32>
    %cst_41 = arith.constant 9.99999997E-7 : f32
    %79 = vector.broadcast %cst_41 : f32 to vector<1x8x128xf32>
    %80 = arith.addf %74, %79 : vector<1x8x128xf32>
    %81 = math.log %80 : vector<1x8x128xf32>
    %82 = arith.addf %49, %81 : vector<1x8x128xf32>
    %cst_42 = arith.constant 0.000000e+00 : f32
    %83 = vector.broadcast %cst_42 : f32 to vector<1x8x128xf32>
    %84 = arith.cmpf ogt, %7, %83 : vector<1x8x128xf32>
    %cst_43 = arith.constant 9.99999543E-7 : f32
    %cst_44 = arith.constant -13.8155107 : f32
    %85 = vector.broadcast %cst_43 : f32 to vector<1x8x128xf32>
    %86 = vector.broadcast %cst_44 : f32 to vector<1x8x128xf32>
    %87 = arith.select %84, %85, %86 : vector<1x8x128xi1>, vector<1x8x128xf32>
    %c0_45 = arith.constant 0 : index
    %c0_46 = arith.constant 0 : index
    %c0_47 = arith.constant 0 : index
    %88 = vector.load %arg4[%c0_45, %c0_46, %c0_47] : memref<1x1x1xf32, #tpu.memory_space<vmem>>, vector<1x1x1xf32>
    %cst_48 = arith.constant 0.000000e+00 : f32
    %89 = vector.broadcast %cst_48 : f32 to vector<1x1x1xf32>
    %90 = arith.cmpf ogt, %88, %89 : vector<1x1x1xf32>
    %91 = vector.shape_cast %90 : vector<1x1x1xi1> to vector<1x1x1xi1>
    %92 = vector.broadcast %91 : vector<1x1x1xi1> to vector<1x8x128xi1>
    %93 = arith.select %92, %87, %78 : vector<1x8x128xi1>, vector<1x8x128xf32>
    %cst_49 = arith.constant -1.000000e+30 : f32
    %94 = vector.broadcast %cst_49 : f32 to vector<1x8x128xf32>
    %95 = arith.select %2, %93, %94 : vector<1x8x128xi1>, vector<1x8x128xf32>
    %96 = vector.shape_cast %90 : vector<1x1x1xi1> to vector<1x1x1xi1>
    %97 = vector.broadcast %96 : vector<1x1x1xi1> to vector<1x8x128xi1>
    %98 = arith.select %97, %44, %82 : vector<1x8x128xi1>, vector<1x8x128xf32>
    %cst_50 = arith.constant -1.000000e+30 : f32
    %99 = vector.broadcast %cst_50 : f32 to vector<1x8x128xf32>
    %100 = arith.select %2, %98, %99 : vector<1x8x128xi1>, vector<1x8x128xf32>
    %cst_51 = arith.constant dense<0xFF800000> : vector<1x8xf32>
    %101 = vector.multi_reduction <maximumf>, %95, %cst_51 [2] : vector<1x8x128xf32> to vector<1x8xf32>
    %102 = vector.shape_cast %101 : vector<1x8xf32> to vector<1x8x1xf32>
    %103 = vector.broadcast %102 : vector<1x8x1xf32> to vector<1x8x128xf32>
    %104 = arith.subf %95, %103 : vector<1x8x128xf32>
    %105 = math.exp %104 : vector<1x8x128xf32>
    %cst_52 = arith.constant dense<0.000000e+00> : vector<1x8xf32>
    %106 = vector.multi_reduction <add>, %105, %cst_52 [2] : vector<1x8x128xf32> to vector<1x8xf32>
    %107 = vector.shape_cast %106 : vector<1x8xf32> to vector<1x8x1xf32>
    %108 = vector.broadcast %107 : vector<1x8x1xf32> to vector<1x8x128xf32>
    %109 = arith.divf %105, %108 : vector<1x8x128xf32>
    %110 = vector.broadcast %102 : vector<1x8x1xf32> to vector<1x8x128xf32>
    %111 = arith.subf %95, %110 : vector<1x8x128xf32>
    %112 = math.log %107 : vector<1x8x1xf32>
    %113 = vector.broadcast %112 : vector<1x8x1xf32> to vector<1x8x128xf32>
    %114 = arith.subf %111, %113 : vector<1x8x128xf32>
    %cst_53 = arith.constant dense<0xFF800000> : vector<1x8xf32>
    %115 = vector.multi_reduction <maximumf>, %100, %cst_53 [2] : vector<1x8x128xf32> to vector<1x8xf32>
    %116 = vector.shape_cast %115 : vector<1x8xf32> to vector<1x8x1xf32>
    %117 = vector.broadcast %116 : vector<1x8x1xf32> to vector<1x8x128xf32>
    %118 = arith.subf %100, %117 : vector<1x8x128xf32>
    %119 = math.exp %118 : vector<1x8x128xf32>
    %cst_54 = arith.constant dense<0.000000e+00> : vector<1x8xf32>
    %120 = vector.multi_reduction <add>, %119, %cst_54 [2] : vector<1x8x128xf32> to vector<1x8xf32>
    %121 = vector.shape_cast %120 : vector<1x8xf32> to vector<1x8x1xf32>
    %122 = vector.broadcast %116 : vector<1x8x1xf32> to vector<1x8x128xf32>
    %123 = arith.subf %100, %122 : vector<1x8x128xf32>
    %124 = math.log %121 : vector<1x8x1xf32>
    %125 = vector.broadcast %124 : vector<1x8x1xf32> to vector<1x8x128xf32>
    %126 = arith.subf %123, %125 : vector<1x8x128xf32>
    %127 = arith.subf %114, %126 : vector<1x8x128xf32>
    %128 = arith.mulf %109, %127 : vector<1x8x128xf32>
    %129 = arith.mulf %7, %71 : vector<1x8x128xf32>
    %cst_55 = arith.constant 0.000000e+00 : f32
    %130 = vector.broadcast %cst_55 : f32 to vector<1x8x128xf32>
    %131 = arith.subf %130, %129 : vector<1x8x128xf32>
    %cst_56 = arith.constant dense<0.000000e+00> : vector<1x8xf32>
    %132 = vector.multi_reduction <add>, %128, %cst_56 [2] : vector<1x8x128xf32> to vector<1x8xf32>
    %133 = vector.shape_cast %132 : vector<1x8xf32> to vector<1x8x1xf32>
    %cst_57 = arith.constant dense<0.000000e+00> : vector<1x1xf32>
    %134 = vector.multi_reduction <add>, %133, %cst_57 [1] : vector<1x8x1xf32> to vector<1x1xf32>
    %135 = vector.shape_cast %134 : vector<1x1xf32> to vector<1x1x1xf32>
    %cst_58 = arith.constant dense<0.000000e+00> : vector<1x8xf32>
    %136 = vector.multi_reduction <add>, %131, %cst_58 [2] : vector<1x8x128xf32> to vector<1x8xf32>
    %137 = vector.shape_cast %136 : vector<1x8xf32> to vector<1x8x1xf32>
    %cst_59 = arith.constant dense<0.000000e+00> : vector<1x1xf32>
    %138 = vector.multi_reduction <add>, %137, %cst_59 [1] : vector<1x8x1xf32> to vector<1x1xf32>
    %139 = vector.shape_cast %138 : vector<1x1xf32> to vector<1x1x1xf32>
    %c10_i32_60 = arith.constant 10 : i32
    %140 = vector.broadcast %c10_i32_60 : i32 to vector<1x8x128xi32>
    %141 = arith.cmpi eq, %0, %140 : vector<1x8x128xi32>
    %142 = arith.sitofp %23 : vector<1x8x1xi32> to vector<1x8x1xf32>
    %143 = vector.shape_cast %142 : vector<1x8x1xf32> to vector<1x8x1xf32>
    %144 = vector.broadcast %143 : vector<1x8x1xf32> to vector<1x8x128xf32>
    %145 = arith.select %141, %144, %42 : vector<1x8x128xi1>, vector<1x8x128xf32>
    %c0_61 = arith.constant 0 : index
    %c0_62 = arith.constant 0 : index
    %c0_63 = arith.constant 0 : index
    %146 = vector.load %arg10[%c0_61, %c0_62, %c0_63] : memref<1x8x128xf32, #tpu.memory_space<vmem>>, vector<1x8x128xf32>
    tpu.vector_store %arg10[%c0_61, %c0_62, %c0_63], %145 {strides = array<i32>} : memref<1x8x128xf32, #tpu.memory_space<vmem>>, vector<1x8x128xf32>,
    %147 = tpu.iota {dimensions = array<i32: 2>} : vector<1x1x128xi32>
    %c0_i32 = arith.constant 0 : i32
    %148 = vector.broadcast %c0_i32 : i32 to vector<1x1x128xi32>
    %149 = arith.cmpi eq, %147, %148 : vector<1x1x128xi32>
    %c1_i32 = arith.constant 1 : i32
    %150 = vector.broadcast %c1_i32 : i32 to vector<1x1x128xi32>
    %151 = arith.cmpi eq, %147, %150 : vector<1x1x128xi32>
    %cst_64 = arith.constant 0.000000e+00 : f32
    %152 = vector.shape_cast %139 : vector<1x1x1xf32> to vector<1x1x1xf32>
    %153 = vector.broadcast %152 : vector<1x1x1xf32> to vector<1x1x128xf32>
    %154 = vector.broadcast %cst_64 : f32 to vector<1x1x128xf32>
    %155 = arith.select %151, %153, %154 : vector<1x1x128xi1>, vector<1x1x128xf32>
    %156 = vector.shape_cast %135 : vector<1x1x1xf32> to vector<1x1x1xf32>
    %157 = vector.broadcast %156 : vector<1x1x1xf32> to vector<1x1x128xf32>
    %158 = arith.select %149, %157, %155 : vector<1x1x128xi1>, vector<1x1x128xf32>
    %c0_65 = arith.constant 0 : index
    %c0_66 = arith.constant 0 : index
    %c0_67 = arith.constant 0 : index
    %159 = vector.load %arg11[%c0_65, %c0_66, %c0_67] : memref<1x1x128xf32, #tpu.memory_space<vmem>>, vector<1x1x128xf32>
    tpu.vector_store %arg11[%c0_65, %c0_66, %c0_67], %158 {strides = array<i32>} : memref<1x1x128xf32, #tpu.memory_space<vmem>>, vector<1x1x128xf32>,
    return
  }
  func.func @transform_0(%arg0: i32) -> (i32, i32, i32) {
    %c0_i32 = arith.constant 0 : i32
    %c0_i32_0 = arith.constant 0 : i32
    %c0_i32_1 = arith.constant 0 : i32
    return %arg0, %c0_i32, %c0_i32_0 : i32, i32, i32
  }
  func.func @transform_1(%arg0: i32) -> (i32, i32, i32) {
    %c0_i32 = arith.constant 0 : i32
    %c0_i32_0 = arith.constant 0 : i32
    %c0_i32_1 = arith.constant 0 : i32
    return %arg0, %c0_i32, %c0_i32_0 : i32, i32, i32
  }
  func.func @transform_2(%arg0: i32) -> (i32, i32, i32) {
    %c0_i32 = arith.constant 0 : i32
    %c0_i32_0 = arith.constant 0 : i32
    %c0_i32_1 = arith.constant 0 : i32
    return %arg0, %c0_i32, %c0_i32_0 : i32, i32, i32
  }
  func.func @transform_3(%arg0: i32) -> (i32, i32, i32) {
    %c0_i32 = arith.constant 0 : i32
    %c0_i32_0 = arith.constant 0 : i32
    %c0_i32_1 = arith.constant 0 : i32
    return %arg0, %c0_i32, %c0_i32_0 : i32, i32, i32
  }
  func.func @transform_4(%arg0: i32) -> (i32, i32) {
    %c0_i32 = arith.constant 0 : i32
    %c0_i32_0 = arith.constant 0 : i32
    %c0_i32_1 = arith.constant 0 : i32
    return %c0_i32, %c0_i32_0 : i32, i32
  }
  func.func @transform_5(%arg0: i32) -> (i32, i32) {
    %c0_i32 = arith.constant 0 : i32
    %c0_i32_0 = arith.constant 0 : i32
    %c0_i32_1 = arith.constant 0 : i32
    return %c0_i32, %c0_i32_0 : i32, i32
  }
  func.func @transform_6(%arg0: i32) -> (i32, i32, i32) {
    %c0_i32 = arith.constant 0 : i32
    %c0_i32_0 = arith.constant 0 : i32
    %c0_i32_1 = arith.constant 0 : i32
    return %arg0, %c0_i32, %c0_i32_0 : i32, i32, i32
  }
  func.func @transform_7(%arg0: i32) -> (i32, i32, i32) {
    %c0_i32 = arith.constant 0 : i32
    %c0_i32_0 = arith.constant 0 : i32
    %c0_i32_1 = arith.constant 0 : i32
    return %arg0, %c0_i32, %c0_i32_0 : i32, i32, i32
  }
  func.func @transform_8(%arg0: i32) -> (i32, i32, i32) {
    %c0_i32 = arith.constant 0 : i32
    %c0_i32_0 = arith.constant 0 : i32
    %c0_i32_1 = arith.constant 0 : i32
    return %arg0, %c0_i32, %c0_i32_0 : i32, i32, i32
  }
  func.func @transform_9(%arg0: i32) -> (i32, i32, i32) {
    %c0_i32 = arith.constant 0 : i32
    %c0_i32_0 = arith.constant 0 : i32
    %c0_i32_1 = arith.constant 0 : i32
    return %arg0, %c0_i32, %c0_i32_0 : i32, i32, i32
  }
  func.func @transform_10(%arg0: i32) -> (i32, i32, i32) {
    %c0_i32 = arith.constant 0 : i32
    %c0_i32_0 = arith.constant 0 : i32
    %c0_i32_1 = arith.constant 0 : i32
    return %arg0, %c0_i32, %c0_i32_0 : i32, i32, i32
  }
}

</mosaic_0001>

<llo_original>
// kernel: tpu_custom_call.1
$region0: #{tpu_custom_call.1}
  #allocation0 [shape = 'u32[]', space=smem, size = 0x4, offset = 0x4, fixed_abs, tag = 'smem constant byte address 0x4 - core index']
  #allocation1 [shape = 'u32[144,128]{1,0:T(1,128)}', space=vmem, size = 0x12000, scoped, tag = 'internal scratch']
  %s0 = inlined_call_operand.vmem [shape: s32[2,8,1], index: 0, kind: input, shape index: {}]
  %s1 = inlined_call_operand.vmem [shape: f32[2,8,128], index: 1, kind: input, shape index: {}]
  %s2 = inlined_call_operand.vmem [shape: f32[2,1,32], index: 2, kind: input, shape index: {}]
  %s3 = inlined_call_operand.vmem [shape: f32[2,1,1], index: 3, kind: input, shape index: {}]
  %s4 = inlined_call_operand.vmem [shape: bf16[128,32], index: 4, kind: input, shape index: {}]
  %s5 = inlined_call_operand.vmem [shape: bf16[32,128], index: 5, kind: input, shape index: {}]
  %s6 = inlined_call_operand.hbm [shape: bf16[2,128,128], index: 6, kind: input, shape index: {}]
  %s7 = inlined_call_operand.hbm [shape: bf16[2,128,128], index: 7, kind: input, shape index: {}]
  %s8 = inlined_call_operand.hbm [shape: bf16[2,128,128], index: 8, kind: input, shape index: {}]
  %s9 = inlined_call_operand.hbm [shape: f32[2,8,128], index: 9, kind: output, shape index: {0}]
  %s10 = inlined_call_operand.hbm [shape: f32[2,1,128], index: 10, kind: output, shape index: {1}]
  %11 = xla_tuple %s9, %s10
  %s12 = sld [smem:[#allocation0]]
  $region89: #{tpu_custom_call.1} parent=0
    _
  %s14 = ssub.s32 1, %s12
  %s15 = scalar_select 0, %s14, %s12
  $region1: #{tpu_custom_call.1} parent=0
    #allocation2 [shape = 'u8[65536]{0}', space=vmem, size = 0x10000, scoped, tag = 'input window, operand 6']
    #allocation3 [shape = 's32[2]{0}', space=sflag, size = 0x8, scoped, tag = 'scoped memory for tpu_custom_call.1']
    #allocation4 [shape = 's32[2]{0}', space=sflag, size = 0x8, scoped, tag = 'scoped memory for tpu_custom_call.1']
    #allocation5 [shape = 'u8[65536]{0}', space=vmem, size = 0x10000, scoped, tag = 'input window, operand 7']
    #allocation6 [shape = 's32[2]{0}', space=sflag, size = 0x8, scoped, tag = 'scoped memory for tpu_custom_call.1']
    #allocation7 [shape = 'u8[65536]{0}', space=vmem, size = 0x10000, scoped, tag = 'input window, operand 8']
    #allocation8 [shape = 'u8[8192]{0}', space=vmem, size = 0x2000, scoped, tag = 'output window, operand 0']
    #allocation9 [shape = 'u8[1024]{0}', space=vmem, size = 0x400, scoped, tag = 'output window, operand 1']
    #allocation10 [shape = 's32[2]{0}', space=sflag, size = 0x8, scoped, tag = 'scoped memory for tpu_custom_call.1']
    %16 = vsyncpa [#allocation3], 0
    %s17 = scalar_lea.sflag [#allocation3], 1
    %18 = vsyncpa %s17, 0
    %19 = vsyncpa [#allocation6], 0
    %s20 = scalar_lea.sflag [#allocation6], 1
    %21 = vsyncpa %s20, 0
    %22 = vsyncpa [#allocation4], 0
    %s23 = scalar_lea.sflag [#allocation4], 1
    %24 = vsyncpa %s23, 0
    %25 = vsyncpa [#allocation10], 0
    %s26 = scalar_lea.sflag [#allocation10], 1
    %27 = vsyncpa %s26, 0
    loop: start=0, step=1, limit=4
    $region2: #{tpu_custom_call.1} parent=1 // loop_pre_header
      _
    $region3: #{tpu_custom_call.1} parent=1 // loop_header
      %s29 = sphi 0, %s33
      %p30 = scmp.ge.s32.totalorder %s29, 4
      %s39 = sphi 0, %s41
      %s42 = sphi 0, %s39
      %s43 = sphi 0, %s42
      %s59 = sphi 0, %s43
      %s65 = sphi 0, %s67
      %s68 = sphi 0, %s65
      %s69 = sphi 0, %s68
      %s85 = sphi 0, %s69
      %s91 = sphi 0, %s93
      %s94 = sphi 0, %s91
      %s95 = sphi 0, %s94
      %s111 = sphi 0, %s95
      %s117 = sphi 0, %s119
      %s120 = sphi 0, %s117
      %s121 = sphi 0, %s120
      %s137 = sphi 0, %s121
      %s141 = sphi 0, %s141
      %s143 = sphi 0, %s141
      %s144 = sphi 0, %s143
      %s158 = sphi 0, %s144
      %s162 = sphi 0, %s162
      %s164 = sphi 0, %s162
      %s165 = sphi 0, %s164
      %s179 = sphi 0, %s165
      %s185 = sphi 0, %s187
      %s188 = sphi 0, %s185
      %s189 = sphi 0, %s188
      %s205 = sphi 0, %s189
      %s211 = sphi 0, %s213
      %s214 = sphi 0, %s211
      %s215 = sphi 0, %s214
      %s231 = sphi 0, %s215
      %s237 = sphi 0, %s239
      %s240 = sphi 0, %s237
      %s241 = sphi 0, %s240
      %s257 = sphi 0, %s241
      %s263 = sphi 0, %s265
      %s266 = sphi 0, %s263
      %s267 = sphi 0, %s266
      %s283 = sphi 0, %s267
      %s289 = sphi 0, %s291
      %s292 = sphi 0, %s289
      %s293 = sphi 0, %s292
      %s309 = sphi 0, %s293
    $region4: #{tpu_custom_call.1} parent=1 // loop_header_branch
      %32 = sbr.rel (%p30) target = $region8
    $region5: #{tpu_custom_call.1} parent=1 // loop_body
      %s34 = ssub.s32 %s29, 1
      %s35 = ssub.s32 %s29, 2
      %s36 = sadd.s32 %s29, 1
      %s37 = ssub.s32 %s29, %s36
      %p38 = scmp.eq.s32.totalorder %s37, 0
      %s40 = sadd.s32 %s39, 1
      %s41 = scalar_select %p38, %s39, %s40
      %p44 = pneg %p38
      %p45 = scmp.eq.s32.totalorder %s29, 1
      %p46 = por %p44, %p45
      %p47 = scmp.ne.s32.totalorder %s39, %s42
      %p48 = scmp.eq.s32.totalorder %s29, 0
      %p49 = por %p47, %p48
      %p50 = scmp.ne.s32.totalorder %s39, %s42
      %p51 = scmp.eq.s32.totalorder %s34, 1
      %p52 = por %p50, %p51
      %p53 = scmp.ne.s32.totalorder %s42, %s43
      %p54 = scmp.eq.s32.totalorder %s34, 0
      %p55 = por %p53, %p54
      %p56 = scmp.ne.s32.totalorder %s42, %s43
      %p57 = scmp.eq.s32.totalorder %s35, 1
      %p58 = por %p56, %p57
      %p60 = scmp.ne.s32.totalorder %s43, %s59
      %p61 = scmp.eq.s32.totalorder %s35, 0
      %p62 = por %p60, %p61
      %s63 = ssub.s32 %s29, %s36
      %p64 = scmp.eq.s32.totalorder %s63, 0
      %s66 = sadd.s32 %s65, 1
      %s67 = scalar_select %p64, %s65, %s66
      %p70 = pneg %p64
      %p71 = scmp.eq.s32.totalorder %s29, 1
      %p72 = por %p70, %p71
      %p73 = scmp.ne.s32.totalorder %s65, %s68
      %p74 = scmp.eq.s32.totalorder %s29, 0
      %p75 = por %p73, %p74
      %p76 = scmp.ne.s32.totalorder %s65, %s68
      %p77 = scmp.eq.s32.totalorder %s34, 1
      %p78 = por %p76, %p77
      %p79 = scmp.ne.s32.totalorder %s68, %s69
      %p80 = scmp.eq.s32.totalorder %s34, 0
      %p81 = por %p79, %p80
      %p82 = scmp.ne.s32.totalorder %s68, %s69
      %p83 = scmp.eq.s32.totalorder %s35, 1
      %p84 = por %p82, %p83
      %p86 = scmp.ne.s32.totalorder %s69, %s85
      %p87 = scmp.eq.s32.totalorder %s35, 0
      %p88 = por %p86, %p87
      %s89 = ssub.s32 %s29, %s36
      %p90 = scmp.eq.s32.totalorder %s89, 0
      %s92 = sadd.s32 %s91, 1
      %s93 = scalar_select %p90, %s91, %s92
      %p96 = pneg %p90
      %p97 = scmp.eq.s32.totalorder %s29, 1
      %p98 = por %p96, %p97
      %p99 = scmp.ne.s32.totalorder %s91, %s94
      %p100 = scmp.eq.s32.totalorder %s29, 0
      %p101 = por %p99, %p100
      %p102 = scmp.ne.s32.totalorder %s91, %s94
      %p103 = scmp.eq.s32.totalorder %s34, 1
      %p104 = por %p102, %p103
      %p105 = scmp.ne.s32.totalorder %s94, %s95
      %p106 = scmp.eq.s32.totalorder %s34, 0
      %p107 = por %p105, %p106
      %p108 = scmp.ne.s32.totalorder %s94, %s95
      %p109 = scmp.eq.s32.totalorder %s35, 1
      %p110 = por %p108, %p109
      %p112 = scmp.ne.s32.totalorder %s95, %s111
      %p113 = scmp.eq.s32.totalorder %s35, 0
      %p114 = por %p112, %p113
      %s115 = ssub.s32 %s29, %s36
      %p116 = scmp.eq.s32.totalorder %s115, 0
      %s118 = sadd.s32 %s117, 1
      %s119 = scalar_select %p116, %s117, %s118
      %p122 = pneg %p116
      %p123 = scmp.eq.s32.totalorder %s29, 1
      %p124 = por %p122, %p123
      %p125 = scmp.ne.s32.totalorder %s117, %s120
      %p126 = scmp.eq.s32.totalorder %s29, 0
      %p127 = por %p125, %p126
      %p128 = scmp.ne.s32.totalorder %s117, %s120
      %p129 = scmp.eq.s32.totalorder %s34, 1
      %p130 = por %p128, %p129
      %p131 = scmp.ne.s32.totalorder %s120, %s121
      %p132 = scmp.eq.s32.totalorder %s34, 0
      %p133 = por %p131, %p132
      %p134 = scmp.ne.s32.totalorder %s120, %s121
      %p135 = scmp.eq.s32.totalorder %s35, 1
      %p136 = por %p134, %p135
      %p138 = scmp.ne.s32.totalorder %s121, %s137
      %p139 = scmp.eq.s32.totalorder %s35, 0
      %p140 = por %p138, %p139
      %s142 = sadd.s32 %s141, 1
      %p145 = scmp.eq.s32.totalorder %s29, 1
      %p146 = scmp.ne.s32.totalorder %s141, %s143
      %p147 = scmp.eq.s32.totalorder %s29, 0
      %p148 = por %p146, %p147
      %p149 = scmp.ne.s32.totalorder %s141, %s143
      %p150 = scmp.eq.s32.totalorder %s34, 1
      %p151 = por %p149, %p150
      %p152 = scmp.ne.s32.totalorder %s143, %s144
      %p153 = scmp.eq.s32.totalorder %s34, 0
      %p154 = por %p152, %p153
      %p155 = scmp.ne.s32.totalorder %s143, %s144
      %p156 = scmp.eq.s32.totalorder %s35, 1
      %p157 = por %p155, %p156
      %p159 = scmp.ne.s32.totalorder %s144, %s158
      %p160 = scmp.eq.s32.totalorder %s35, 0
      %p161 = por %p159, %p160
      %s163 = sadd.s32 %s162, 1
      %p166 = scmp.eq.s32.totalorder %s29, 1
      %p167 = scmp.ne.s32.totalorder %s162, %s164
      %p168 = scmp.eq.s32.totalorder %s29, 0
      %p169 = por %p167, %p168
      %p170 = scmp.ne.s32.totalorder %s162, %s164
      %p171 = scmp.eq.s32.totalorder %s34, 1
      %p172 = por %p170, %p171
      %p173 = scmp.ne.s32.totalorder %s164, %s165
      %p174 = scmp.eq.s32.totalorder %s34, 0
      %p175 = por %p173, %p174
      %p176 = scmp.ne.s32.totalorder %s164, %s165
      %p177 = scmp.eq.s32.totalorder %s35, 1
      %p178 = por %p176, %p177
      %p180 = scmp.ne.s32.totalorder %s165, %s179
      %p181 = scmp.eq.s32.totalorder %s35, 0
      %p182 = por %p180, %p181
      %s183 = ssub.s32 %s29, %s36
      %p184 = scmp.eq.s32.totalorder %s183, 0
      %s186 = sadd.s32 %s185, 1
      %s187 = scalar_select %p184, %s185, %s186
      %p190 = pneg %p184
      %p191 = scmp.eq.s32.totalorder %s29, 1
      %p192 = por %p190, %p191
      %p193 = scmp.ne.s32.totalorder %s185, %s188
      %p194 = scmp.eq.s32.totalorder %s29, 0
      %p195 = por %p193, %p194
      %p196 = scmp.ne.s32.totalorder %s185, %s188
      %p197 = scmp.eq.s32.totalorder %s34, 1
      %p198 = por %p196, %p197
      %p199 = scmp.ne.s32.totalorder %s188, %s189
      %p200 = scmp.eq.s32.totalorder %s34, 0
      %p201 = por %p199, %p200
      %p202 = scmp.ne.s32.totalorder %s188, %s189
      %p203 = scmp.eq.s32.totalorder %s35, 1
      %p204 = por %p202, %p203
      %p206 = scmp.ne.s32.totalorder %s189, %s205
      %p207 = scmp.eq.s32.totalorder %s35, 0
      %p208 = por %p206, %p207
      %s209 = ssub.s32 %s29, %s36
      %p210 = scmp.eq.s32.totalorder %s209, 0
      %s212 = sadd.s32 %s211, 1
      %s213 = scalar_select %p210, %s211, %s212
      %p216 = pneg %p210
      %p217 = scmp.eq.s32.totalorder %s29, 1
      %p218 = por %p216, %p217
      %p219 = scmp.ne.s32.totalorder %s211, %s214
      %p220 = scmp.eq.s32.totalorder %s29, 0
      %p221 = por %p219, %p220
      %p222 = scmp.ne.s32.totalorder %s211, %s214
      %p223 = scmp.eq.s32.totalorder %s34, 1
      %p224 = por %p222, %p223
      %p225 = scmp.ne.s32.totalorder %s214, %s215
      %p226 = scmp.eq.s32.totalorder %s34, 0
      %p227 = por %p225, %p226
      %p228 = scmp.ne.s32.totalorder %s214, %s215
      %p229 = scmp.eq.s32.totalorder %s35, 1
      %p230 = por %p228, %p229
      %p232 = scmp.ne.s32.totalorder %s215, %s231
      %p233 = scmp.eq.s32.totalorder %s35, 0
      %p234 = por %p232, %p233
      %s235 = ssub.s32 %s29, %s36
      %p236 = scmp.eq.s32.totalorder %s235, 0
      %s238 = sadd.s32 %s237, 1
      %s239 = scalar_select %p236, %s237, %s238
      %p242 = pneg %p236
      %p243 = scmp.eq.s32.totalorder %s29, 1
      %p244 = por %p242, %p243
      %p245 = scmp.ne.s32.totalorder %s237, %s240
      %p246 = scmp.eq.s32.totalorder %s29, 0
      %p247 = por %p245, %p246
      %p248 = scmp.ne.s32.totalorder %s237, %s240
      %p249 = scmp.eq.s32.totalorder %s34, 1
      %p250 = por %p248, %p249
      %p251 = scmp.ne.s32.totalorder %s240, %s241
      %p252 = scmp.eq.s32.totalorder %s34, 0
      %p253 = por %p251, %p252
      %p254 = scmp.ne.s32.totalorder %s240, %s241
      %p255 = scmp.eq.s32.totalorder %s35, 1
      %p256 = por %p254, %p255
      %p258 = scmp.ne.s32.totalorder %s241, %s257
      %p259 = scmp.eq.s32.totalorder %s35, 0
      %p260 = por %p258, %p259
      %s261 = ssub.s32 %s29, %s36
      %p262 = scmp.eq.s32.totalorder %s261, 0
      %s264 = sadd.s32 %s263, 1
      %s265 = scalar_select %p262, %s263, %s264
      %p268 = pneg %p262
      %p269 = scmp.eq.s32.totalorder %s29, 1
      %p270 = por %p268, %p269
      %p271 = scmp.ne.s32.totalorder %s263, %s266
      %p272 = scmp.eq.s32.totalorder %s29, 0
      %p273 = por %p271, %p272
      %p274 = scmp.ne.s32.totalorder %s263, %s266
      %p275 = scmp.eq.s32.totalorder %s34, 1
      %p276 = por %p274, %p275
      %p277 = scmp.ne.s32.totalorder %s266, %s267
      %p278 = scmp.eq.s32.totalorder %s34, 0
      %p279 = por %p277, %p278
      %p280 = scmp.ne.s32.totalorder %s266, %s267
      %p281 = scmp.eq.s32.totalorder %s35, 1
      %p282 = por %p280, %p281
      %p284 = scmp.ne.s32.totalorder %s267, %s283
      %p285 = scmp.eq.s32.totalorder %s35, 0
      %p286 = por %p284, %p285
      %s287 = ssub.s32 %s29, %s36
      %p288 = scmp.eq.s32.totalorder %s287, 0
      %s290 = sadd.s32 %s289, 1
      %s291 = scalar_select %p288, %s289, %s290
      %p294 = pneg %p288
      %p295 = scmp.eq.s32.totalorder %s29, 1
      %p296 = por %p294, %p295
      %p297 = scmp.ne.s32.totalorder %s289, %s292
      %p298 = scmp.eq.s32.totalorder %s29, 0
      %p299 = por %p297, %p298
      %p300 = scmp.ne.s32.totalorder %s289, %s292
      %p301 = scmp.eq.s32.totalorder %s34, 1
      %p302 = por %p300, %p301
      %p303 = scmp.ne.s32.totalorder %s292, %s293
      %p304 = scmp.eq.s32.totalorder %s34, 0
      %p305 = por %p303, %p304
      %p306 = scmp.ne.s32.totalorder %s292, %s293
      %p307 = scmp.eq.s32.totalorder %s35, 1
      %p308 = por %p306, %p307
      %p310 = scmp.ne.s32.totalorder %s293, %s309
      %p311 = scmp.eq.s32.totalorder %s35, 0
      %p312 = por %p310, %p311
      %p313 = scmp.le.s32.totalorder 1, %s29
      %p314 = scmp.lt.s32.totalorder %s29, 3
      %p315 = pnand %p313, %p314
      %p316 = pneg %p315
      // Predicated region
      $region9: #{tpu_custom_call.1} parent=5 // pred_check
        _
      $region10: #{tpu_custom_call.1} parent=5 // pred_check_branch
        %318 = sbr.rel (%p315) target = $region12
      $region11: #{tpu_custom_call.1} parent=5 // pred_region
        %s319 = ssub.s32 %s29, 1
        // Predicated region
        $region13: #{tpu_custom_call.1} parent=11 // pred_check
          %p320 = pneg %p154
        $region14: #{tpu_custom_call.1} parent=11 // pred_check_branch
          %322 = sbr.rel (%p320) target = $region16
        $region15: #{tpu_custom_call.1} parent=11 // pred_region
          _
        $region16: #{tpu_custom_call.1} parent=11 // pred_fallthru
          _
        // Predicated region
        $region17: #{tpu_custom_call.1} parent=11 // pred_check
          %p323 = pneg %p175
        $region18: #{tpu_custom_call.1} parent=11 // pred_check_branch
          %325 = sbr.rel (%p323) target = $region20
        $region19: #{tpu_custom_call.1} parent=11 // pred_region
          _
        $region20: #{tpu_custom_call.1} parent=11 // pred_fallthru
          _
      $region12: #{tpu_custom_call.1} parent=5 // pred_fallthru
        _
      %p326 = scmp.lt.s32.totalorder %s29, 2
      // Predicated region
      $region21: #{tpu_custom_call.1} parent=5 // pred_check
        %p327 = pneg %p326
      $region22: #{tpu_custom_call.1} parent=5 // pred_check_branch
        %329 = sbr.rel (%p327) target = $region24
      $region23: #{tpu_custom_call.1} parent=5 // pred_region
        // Predicated region
        $region25: #{tpu_custom_call.1} parent=23 // pred_check
          %p330 = pneg %p49
        $region26: #{tpu_custom_call.1} parent=23 // pred_check_branch
          %332 = sbr.rel (%p330) target = $region28
        $region27: #{tpu_custom_call.1} parent=23 // pred_region
          %p333 = scmp.lt.s32.totalorder %s29, 1
          %s334 = scalar_select %p333, %s29, 1
          %s335 = smul.addr %s334, 8
          %s336 = scalar_lea.vmem %s0, %s335
        $region28: #{tpu_custom_call.1} parent=23 // pred_fallthru
          _
        // Predicated region
        $region29: #{tpu_custom_call.1} parent=23 // pred_check
          %p337 = pneg %p75
        $region30: #{tpu_custom_call.1} parent=23 // pred_check_branch
          %339 = sbr.rel (%p337) target = $region32
        $region31: #{tpu_custom_call.1} parent=23 // pred_region
          %p340 = scmp.lt.s32.totalorder %s29, 1
          %s341 = scalar_select %p340, %s29, 1
          %s342 = smul.addr %s341, 8
          %s343 = scalar_lea.vmem %s1, %s342
        $region32: #{tpu_custom_call.1} parent=23 // pred_fallthru
          _
        // Predicated region
        $region33: #{tpu_custom_call.1} parent=23 // pred_check
          %p344 = pneg %p101
        $region34: #{tpu_custom_call.1} parent=23 // pred_check_branch
          %346 = sbr.rel (%p344) target = $region36
        $region35: #{tpu_custom_call.1} parent=23 // pred_region
          %p347 = scmp.lt.s32.totalorder %s29, 1
          %s348 = scalar_select %p347, %s29, 1
          %s349 = scalar_lea.vmem %s2, %s348
        $region36: #{tpu_custom_call.1} parent=23 // pred_fallthru
          _
        // Predicated region
        $region37: #{tpu_custom_call.1} parent=23 // pred_check
          %p350 = pneg %p127
        $region38: #{tpu_custom_call.1} parent=23 // pred_check_branch
          %352 = sbr.rel (%p350) target = $region40
        $region39: #{tpu_custom_call.1} parent=23 // pred_region
          %p353 = scmp.lt.s32.totalorder %s29, 1
          %s354 = scalar_select %p353, %s29, 1
          %s355 = scalar_lea.vmem %s3, %s354
        $region40: #{tpu_custom_call.1} parent=23 // pred_fallthru
          _
        // Predicated region
        $region41: #{tpu_custom_call.1} parent=23 // pred_check
          %p356 = pneg %p195
        $region42: #{tpu_custom_call.1} parent=23 // pred_check_branch
          %358 = sbr.rel (%p356) target = $region44
        $region43: #{tpu_custom_call.1} parent=23 // pred_region
          %s359 = sand.u32 %s185, 1
          %s360 = scalar_lea.sflag [#allocation3], %s359
          %s361 = sand.u32 %s185, 1
          %s362 = smul.addr %s361, 64
          %s363 = scalar_lea.vmem [#allocation2], %s362
          %s365 = ssub.s32 1024, 1024
          %366 = vsyncadd %s360, %s365
          %s367 = smul.addr %s29, 16
          %s368 = smul.addr %s367, 64
          %s369 = scalar_lea.hbm %s6, %s368
          %s370 = sshll.u32 %s363, 4
          %s371 = int_to_ptr.vmem [resolvable:$true] %s370
          %376 = dma.hbm_to_vmem [thread:$0]  %s369, 1024, %s371, %s360, 64, 64, 4
        $region44: #{tpu_custom_call.1} parent=23 // pred_fallthru
          _
        // Predicated region
        $region45: #{tpu_custom_call.1} parent=23 // pred_check
          %p377 = pneg %p221
        $region46: #{tpu_custom_call.1} parent=23 // pred_check_branch
          %379 = sbr.rel (%p377) target = $region48
        $region47: #{tpu_custom_call.1} parent=23 // pred_region
          %s380 = sand.u32 %s29, 1
          %s381 = scalar_lea.sflag [#allocation6], %s380
          %s382 = sand.u32 %s211, 1
          %s383 = smul.addr %s382, 64
          %s384 = scalar_lea.vmem [#allocation5], %s383
          %s386 = ssub.s32 1024, 1024
          %387 = vsyncadd %s381, %s386
          %s388 = smul.addr %s29, 16
          %s389 = smul.addr %s388, 64
          %s390 = scalar_lea.hbm %s7, %s389
          %s391 = sshll.u32 %s384, 4
          %s392 = int_to_ptr.vmem [resolvable:$true] %s391
          %397 = dma.hbm_to_vmem [thread:$0]  %s390, 1024, %s392, %s381, 64, 64, 4
        $region48: #{tpu_custom_call.1} parent=23 // pred_fallthru
          _
        // Predicated region
        $region49: #{tpu_custom_call.1} parent=23 // pred_check
          %p398 = pneg %p247
        $region50: #{tpu_custom_call.1} parent=23 // pred_check_branch
          %400 = sbr.rel (%p398) target = $region52
        $region51: #{tpu_custom_call.1} parent=23 // pred_region
          %s401 = sand.u32 %s29, 1
          %s402 = scalar_lea.sflag [#allocation6], %s401
          %s403 = sand.u32 %s237, 1
          %s404 = smul.addr %s403, 64
          %s405 = scalar_lea.vmem [#allocation7], %s404
          %s407 = ssub.s32 1024, 1024
          %408 = vsyncadd %s402, %s407
          %s409 = smul.addr %s29, 16
          %s410 = smul.addr %s409, 64
          %s411 = scalar_lea.hbm %s8, %s410
          %s412 = sshll.u32 %s405, 4
          %s413 = int_to_ptr.vmem [resolvable:$true] %s412
          %418 = dma.hbm_to_vmem [thread:$0]  %s411, 1024, %s413, %s402, 64, 64, 4
        $region52: #{tpu_custom_call.1} parent=23 // pred_fallthru
          _
      $region24: #{tpu_custom_call.1} parent=5 // pred_fallthru
        _
      %p419 = scmp.le.s32.totalorder 1, %s29
      %p420 = scmp.lt.s32.totalorder %s29, 3
      %p421 = pnand %p419, %p420
      %p422 = pneg %p421
      // Predicated region
      $region53: #{tpu_custom_call.1} parent=5 // pred_check
        _
      $region54: #{tpu_custom_call.1} parent=5 // pred_check_branch
        %424 = sbr.rel (%p421) target = $region56
      $region55: #{tpu_custom_call.1} parent=5 // pred_region
        %s425 = ssub.s32 %s29, 1
        %s426 = sand.u32 %s188, 1
        %s427 = scalar_lea.sflag [#allocation3], %s426
        %s428 = sand.u32 %s188, 1
        %s429 = smul.addr %s428, 64
        %s430 = scalar_lea.vmem [#allocation2], %s429
        // Predicated region
        $region57: #{tpu_custom_call.1} parent=55 // pred_check
          %p431 = pneg %p201
        $region58: #{tpu_custom_call.1} parent=55 // pred_check_branch
          %433 = sbr.rel (%p431) target = $region60
        $region59: #{tpu_custom_call.1} parent=55 // pred_region
          %434 = dma.done %s427, 1024
        $region60: #{tpu_custom_call.1} parent=55 // pred_fallthru
          _
        %s435 = sand.u32 %s34, 1
        %s436 = scalar_lea.sflag [#allocation6], %s435
        %s437 = sand.u32 %s214, 1
        %s438 = smul.addr %s437, 64
        %s439 = scalar_lea.vmem [#allocation5], %s438
        // Predicated region
        $region61: #{tpu_custom_call.1} parent=55 // pred_check
          %p440 = pneg %p227
        $region62: #{tpu_custom_call.1} parent=55 // pred_check_branch
          %442 = sbr.rel (%p440) target = $region64
        $region63: #{tpu_custom_call.1} parent=55 // pred_region
          %443 = dma.done %s436, 1024
        $region64: #{tpu_custom_call.1} parent=55 // pred_fallthru
          _
        %s444 = sand.u32 %s34, 1
        %s445 = scalar_lea.sflag [#allocation6], %s444
        %s446 = sand.u32 %s240, 1
        %s447 = smul.addr %s446, 64
        %s448 = scalar_lea.vmem [#allocation7], %s447
        // Predicated region
        $region65: #{tpu_custom_call.1} parent=55 // pred_check
          %p449 = pneg %p253
        $region66: #{tpu_custom_call.1} parent=55 // pred_check_branch
          %451 = sbr.rel (%p449) target = $region68
        $region67: #{tpu_custom_call.1} parent=55 // pred_region
          %452 = dma.done %s445, 1024
        $region68: #{tpu_custom_call.1} parent=55 // pred_fallthru
          _
        %p453 = scmp.lt.s32.totalorder %s34, 1
        %s454 = scalar_select %p453, %s34, 1
        %s455 = smul.addr %s454, 8
        %s456 = scalar_lea.vmem %s0, %s455
        %p457 = pneg %p55
        %p458 = pneg %p52
        %p459 = scmp.lt.s32.totalorder %s34, 1
        %s460 = scalar_select %p459, %s34, 1
        %s461 = smul.addr %s460, 8
        %s462 = scalar_lea.vmem %s1, %s461
        %p463 = pneg %p81
        %p464 = pneg %p78
        %p465 = scmp.lt.s32.totalorder %s34, 1
        %s466 = scalar_select %p465, %s34, 1
        %s467 = scalar_lea.vmem %s2, %s466
        %p468 = pneg %p107
        %p469 = pneg %p104
        %p470 = scmp.lt.s32.totalorder %s34, 1
        %s471 = scalar_select %p470, %s34, 1
        %s472 = scalar_lea.vmem %s3, %s471
        %p473 = pneg %p133
        %p474 = pneg %p130
        %p475 = pneg %p154
        %p476 = pneg %p151
        %p477 = pneg %p175
        %p478 = pneg %p172
        %s479 = sand.u32 %s188, 1
        %s480 = scalar_lea.sflag [#allocation3], %s479
        %s481 = sand.u32 %s188, 1
        %s482 = smul.addr %s481, 64
        %s483 = scalar_lea.vmem [#allocation2], %s482
        %p484 = pneg %p201
        %p485 = pneg %p198
        %s486 = sand.u32 %s34, 1
        %s487 = scalar_lea.sflag [#allocation6], %s486
        %s488 = sand.u32 %s214, 1
        %s489 = smul.addr %s488, 64
        %s490 = scalar_lea.vmem [#allocation5], %s489
        %p491 = pneg %p227
        %p492 = pneg %p224
        %s493 = sand.u32 %s34, 1
        %s494 = scalar_lea.sflag [#allocation6], %s493
        %s495 = sand.u32 %s240, 1
        %s496 = smul.addr %s495, 64
        %s497 = scalar_lea.vmem [#allocation7], %s496
        %p498 = pneg %p253
        %p499 = pneg %p250
        %p500 = pneg %p279
        %p501 = pneg %p276
        %s502 = sand.u32 %s266, 1
        %s503 = scalar_lea.sflag [#allocation4], %s502
        %s504 = sand.u32 %s266, 1
        %s505 = smul.addr %s504, 8
        %s506 = scalar_lea.vmem [#allocation8], %s505
        %p507 = pneg %p305
        %p508 = pneg %p302
        %s509 = sand.u32 %s292, 1
        %s510 = scalar_lea.sflag [#allocation10], %s509
        %s511 = sand.u32 %s292, 1
        %s512 = scalar_lea.vmem [#allocation9], %s511
        %p513 = scmp.lt.s32.totalorder %s34, 1
        %s514 = scalar_select %p513, %s34, 1
        %s515 = smul.addr %s514, 8
        %s516 = scalar_lea.vmem %s0, %s515
        %p517 = scmp.lt.s32.totalorder %s34, 1
        %s518 = scalar_select %p517, %s34, 1
        %s519 = smul.addr %s518, 8
        %s520 = scalar_lea.vmem %s1, %s519
        %p521 = scmp.lt.s32.totalorder %s34, 1
        %s522 = scalar_select %p521, %s34, 1
        %s523 = scalar_lea.vmem %s2, %s522
        %p524 = scmp.lt.s32.totalorder %s34, 1
        %s525 = scalar_select %p524, %s34, 1
        %s526 = scalar_lea.vmem %s3, %s525
        %v528 = vlaneseq
        %v529 = vand.u32 %v528, 127
        %vm530 = vcmp.lt.s32.totalorder %v529, 10
        %v531 = vld [vmem:[%s516] sm:$0xff]
        %532 = vset.pattern.permute.xlu0 0
        %533 = vperm.xlu0 %532, %v531
        %v534 = vpop.permute.xlu0 %533
        %vm535 = vcmp.eq.s32.totalorder %v529, %v534
        %v536 = vsel %vm535, 1, 0
        %v537 = vcvt.s32.f32 %v536
        %v538 = vpack.c.bf16 %v537, %v537
        %v539 = vld [vmem:[%s430] sm:$0xf]
        %v540 = vld [vmem:[%s430 + $0x4] sm:$0xf]
        %v541 = vld [vmem:[%s430 + $0x8] sm:$0xf]
        %v542 = vld [vmem:[%s430 + $0xc] sm:$0xf]
        %v543 = vld [vmem:[%s430 + $0x10] sm:$0xf]
        %v544 = vld [vmem:[%s430 + $0x14] sm:$0xf]
        %v545 = vld [vmem:[%s430 + $0x18] sm:$0xf]
        %v546 = vld [vmem:[%s430 + $0x1c] sm:$0xf]
        %v547 = vld [vmem:[%s430 + $0x20] sm:$0xf]
        %v548 = vld [vmem:[%s430 + $0x24] sm:$0xf]
        %v549 = vld [vmem:[%s430 + $0x28] sm:$0xf]
        %v550 = vld [vmem:[%s430 + $0x2c] sm:$0xf]
        %v551 = vld [vmem:[%s430 + $0x30] sm:$0xf]
        %v552 = vld [vmem:[%s430 + $0x34] sm:$0xf]
        %v553 = vld [vmem:[%s430 + $0x38] sm:$0xf]
        %v554 = vld [vmem:[%s430 + $0x3c] sm:$0xf]
        %v571 = vunpack.c.l.b16 %v539
        %v572 = vunpack.c.l.b16 %v540
        %v573 = vunpack.c.l.b16 %v541
        %v574 = vunpack.c.l.b16 %v542
        %v575 = vunpack.c.l.b16 %v543
        %v576 = vunpack.c.l.b16 %v544
        %v577 = vunpack.c.l.b16 %v545
        %v578 = vunpack.c.l.b16 %v546
        %v579 = vunpack.c.l.b16 %v547
        %v580 = vunpack.c.l.b16 %v548
        %v581 = vunpack.c.l.b16 %v549
        %v582 = vunpack.c.l.b16 %v550
        %v583 = vunpack.c.l.b16 %v551
        %v584 = vunpack.c.l.b16 %v552
        %v585 = vunpack.c.l.b16 %v553
        %v586 = vunpack.c.l.b16 %v554
        %v587 = vpack.c.b16 %v572, %v571
        %v588 = vpack.c.b16 %v574, %v573
        %v589 = vpack.c.b16 %v576, %v575
        %v590 = vpack.c.b16 %v578, %v577
        %v591 = vpack.c.b16 %v580, %v579
        %v592 = vpack.c.b16 %v582, %v581
        %v593 = vpack.c.b16 %v584, %v583
        %v594 = vpack.c.b16 %v586, %v585
        %603 = vmatprep.subr.bf16.mxu0 0
        %604 = vmatpush1.bf16.msra.mxu0 %v594
        %605 = vmatprep.subr.bf16.mxu0 0
        %606 = vmatpush1.bf16.msra.mxu0 %v593
        %607 = vmatprep.subr.bf16.mxu0 0
        %608 = vmatpush1.bf16.msra.mxu0 %v592
        %609 = vmatprep.subr.bf16.mxu0 0
        %610 = vmatpush1.bf16.msra.mxu0 %v591
        %611 = vmatprep.subr.bf16.mxu0 0
        %612 = vmatpush1.bf16.msra.mxu0 %v590
        %613 = vmatprep.subr.bf16.mxu0 0
        %614 = vmatpush1.bf16.msra.mxu0 %v589
        %615 = vmatprep.subr.bf16.mxu0 0
        %616 = vmatpush1.bf16.msra.mxu0 %v588
        %617 = vmatprep.subr.bf16.mxu0 0
        %618 = vmatpush1.bf16.msra.mxu0 %v587
        %619 = vmatprep.subr.bf16.mxu0 0
        %620 = vmatpush2.bf16.msra.mxu0 0
        %621 = vmatprep.subr.bf16.mxu0 0
        %622 = vmatpush2.bf16.msra.mxu0 0
        %623 = vmatprep.subr.bf16.mxu0 0
        %624 = vmatpush2.bf16.msra.mxu0 0
        %625 = vmatprep.subr.bf16.mxu0 0
        %626 = vmatpush2.bf16.msra.mxu0 0
        %627 = vmatprep.subr.bf16.mxu0 0
        %628 = vmatpush2.bf16.msra.mxu0 0
        %629 = vmatprep.subr.bf16.mxu0 0
        %630 = vmatpush2.bf16.msra.mxu0 0
        %631 = vmatprep.subr.bf16.mxu0 0
        %632 = vmatpush2.bf16.msra.mxu0 0
        %633 = vmatprep.subr.bf16.mxu0 0
        %634 = vmatpush2.bf16.msra.mxu0 0
        %635 = vmatprep.mubr.bf16.mxu0 0
        %636 = vmatmul.mubr.bf16.gmra.mxu0 %v538
        %v637 = vpop.f32.mrf.mxu0
        %v638 = vadd.f32 1e-06, %v637
        %v639 = vpop.f32.mrf.mxu0
        %v640 = vpop.f32.mrf.mxu0
        %v641 = vpop.f32.mrf.mxu0
        %642 = vdwg.mxu0
        %v643 = vlog2.pop %v638
        %v644 = vmul.f32 %v643, 0.6931472
        %v645 = vld [vmem:[%s520] sm:$0xff]
        %v646 = vadd.f32 %v644, %v645
        %647 = vmax.xlane.f32.xlu0 %v646
        %v648 = vpop.xlane.xlu0 %647
        %vm649 = vcmp.eq.f32.partialorder %v646, %v648
        %v650 = vsel %vm649, %v529, 128
        %v651 = vand.u32 %v650, 65535
        %v652 = vshra.s32 %v650, 16
        %v653 = vcvt.s32.f32 %v651
        %v654 = vcvt.s32.f32 %v652
        %655 = vmin.xlane.f32.xlu0 %v654
        %v656 = vpop.xlane.xlu0 %655
        %vm657 = vcmp.eq.f32.partialorder %v654, %v656
        %v658 = vsel %vm657, %v653, inf
        %659 = vmin.xlane.f32.xlu0 %v658
        %v660 = vpop.xlane.xlu0 %659
        %v661 = vcvt.f32.s32 %v660
        %v662 = vcvt.f32.s32 %v656
        %v663 = vshll.u32 %v662, 16
        %v664 = vadd.s32 %v663, %v661
        %vm665 = vcmp.eq.s32.totalorder %v529, %v664
        %v666 = vsel %vm665, 1, 0
        %v667 = vcvt.s32.f32 %v666
        %v668 = vpack.c.bf16 %v667, %v667
        %v669 = vld [vmem:[%s4] sm:$0xf]
        %v670 = vld [vmem:[%s4 + $0x4] sm:$0xf]
        %v671 = vld [vmem:[%s4 + $0x8] sm:$0xf]
        %v672 = vld [vmem:[%s4 + $0xc] sm:$0xf]
        %v673 = vld [vmem:[%s4 + $0x10] sm:$0xf]
        %v674 = vld [vmem:[%s4 + $0x14] sm:$0xf]
        %v675 = vld [vmem:[%s4 + $0x18] sm:$0xf]
        %v676 = vld [vmem:[%s4 + $0x1c] sm:$0xf]
        %v677 = vld [vmem:[%s4 + $0x20] sm:$0xf]
        %v678 = vld [vmem:[%s4 + $0x24] sm:$0xf]
        %v679 = vld [vmem:[%s4 + $0x28] sm:$0xf]
        %v680 = vld [vmem:[%s4 + $0x2c] sm:$0xf]
        %v681 = vld [vmem:[%s4 + $0x30] sm:$0xf]
        %v682 = vld [vmem:[%s4 + $0x34] sm:$0xf]
        %v683 = vld [vmem:[%s4 + $0x38] sm:$0xf]
        %v684 = vld [vmem:[%s4 + $0x3c] sm:$0xf]
        %v701 = vunpack.c.l.b16 %v669
        %v702 = vunpack.c.l.b16 %v670
        %v703 = vunpack.c.l.b16 %v671
        %v704 = vunpack.c.l.b16 %v672
        %v705 = vunpack.c.l.b16 %v673
        %v706 = vunpack.c.l.b16 %v674
        %v707 = vunpack.c.l.b16 %v675
        %v708 = vunpack.c.l.b16 %v676
        %v709 = vunpack.c.l.b16 %v677
        %v710 = vunpack.c.l.b16 %v678
        %v711 = vunpack.c.l.b16 %v679
        %v712 = vunpack.c.l.b16 %v680
        %v713 = vunpack.c.l.b16 %v681
        %v714 = vunpack.c.l.b16 %v682
        %v715 = vunpack.c.l.b16 %v683
        %v716 = vunpack.c.l.b16 %v684
        %v717 = vpack.c.b16 %v702, %v701
        %v718 = vpack.c.b16 %v704, %v703
        %v719 = vpack.c.b16 %v706, %v705
        %v720 = vpack.c.b16 %v708, %v707
        %v721 = vpack.c.b16 %v710, %v709
        %v722 = vpack.c.b16 %v712, %v711
        %v723 = vpack.c.b16 %v714, %v713
        %v724 = vpack.c.b16 %v716, %v715
        %733 = vmatprep.subr.bf16.mxu0 0
        %734 = vmatpush1.bf16.msra.mxu0 %v724
        %735 = vmatprep.subr.bf16.mxu0 0
        %736 = vmatpush1.bf16.msra.mxu0 %v723
        %737 = vmatprep.subr.bf16.mxu0 0
        %738 = vmatpush1.bf16.msra.mxu0 %v722
        %739 = vmatprep.subr.bf16.mxu0 0
        %740 = vmatpush1.bf16.msra.mxu0 %v721
        %741 = vmatprep.subr.bf16.mxu0 0
        %742 = vmatpush1.bf16.msra.mxu0 %v720
        %743 = vmatprep.subr.bf16.mxu0 0
        %744 = vmatpush1.bf16.msra.mxu0 %v719
        %745 = vmatprep.subr.bf16.mxu0 0
        %746 = vmatpush1.bf16.msra.mxu0 %v718
        %747 = vmatprep.subr.bf16.mxu0 0
        %748 = vmatpush1.bf16.msra.mxu0 %v717
        %749 = vmatprep.subr.bf16.mxu0 0
        %750 = vmatpush2.bf16.msra.mxu0 0
        %751 = vmatprep.subr.bf16.mxu0 0
        %752 = vmatpush2.bf16.msra.mxu0 0
        %753 = vmatprep.subr.bf16.mxu0 0
        %754 = vmatpush2.bf16.msra.mxu0 0
        %755 = vmatprep.subr.bf16.mxu0 0
        %756 = vmatpush2.bf16.msra.mxu0 0
        %757 = vmatprep.subr.bf16.mxu0 0
        %758 = vmatpush2.bf16.msra.mxu0 0
        %759 = vmatprep.subr.bf16.mxu0 0
        %760 = vmatpush2.bf16.msra.mxu0 0
        %761 = vmatprep.subr.bf16.mxu0 0
        %762 = vmatpush2.bf16.msra.mxu0 0
        %763 = vmatprep.subr.bf16.mxu0 0
        %764 = vmatpush2.bf16.msra.mxu0 0
        %765 = vmatprep.mubr.bf16.mxu0 0
        %766 = vmatmul.mubr.bf16.gmra.mxu0 %v538
        %v767 = vpop.f32.mrf.mxu0
        %v768 = vadd.f32 0.0, %v767
        %v769 = vpop.f32.mrf.mxu0
        %v770 = vpop.f32.mrf.mxu0
        %v771 = vpop.f32.mrf.mxu0
        %772 = vdwg.mxu0
        %v773 = vld [vmem:[%s523] sm:$0x1]
        %v775 = vlaneseq
        %v776 = vshrl.u32 %v775, 7
        %v777 = vsub.s32 0, %v776
        %v778 = vrot.slane %v773, %v777
        %v780 = vadd.f32 %v768, %v778
        %v781 = vmax.f32 %v780, 0.0
        %v782 = vpack.c.bf16 %v781, %v781
        %v783 = vld [vmem:[%s5] sm:$0xf]
        %v784 = vld [vmem:[%s5 + $0x4] sm:$0xf]
        %v785 = vld [vmem:[%s5 + $0x8] sm:$0xf]
        %v786 = vld [vmem:[%s5 + $0xc] sm:$0xf]
        %v791 = vunpack.c.l.b16 %v783
        %v792 = vunpack.c.l.b16 %v784
        %v793 = vunpack.c.l.b16 %v785
        %v794 = vunpack.c.l.b16 %v786
        %v795 = vpack.c.b16 %v792, %v791
        %v796 = vpack.c.b16 %v794, %v793
        %vm799 = vcmask 261120
        %v801 = vsel %vm799, %v782, 0
        %803 = vmatprep.subr.bf16.mxu0 0
        %804 = vmatpush1.bf16.msra.mxu0 0
        %805 = vmatprep.subr.bf16.mxu0 0
        %806 = vmatpush1.bf16.msra.mxu0 0
        %807 = vmatprep.subr.bf16.mxu0 0
        %808 = vmatpush1.bf16.msra.mxu0 0
        %809 = vmatprep.subr.bf16.mxu0 0
        %810 = vmatpush1.bf16.msra.mxu0 0
        %811 = vmatprep.subr.bf16.mxu0 0
        %812 = vmatpush1.bf16.msra.mxu0 0
        %813 = vmatprep.subr.bf16.mxu0 0
        %814 = vmatpush1.bf16.msra.mxu0 0
        %815 = vmatprep.subr.bf16.mxu0 0
        %816 = vmatpush1.bf16.msra.mxu0 %v796
        %817 = vmatprep.subr.bf16.mxu0 0
        %818 = vmatpush1.bf16.msra.mxu0 %v795
        %819 = vmatprep.subr.bf16.mxu0 0
        %820 = vmatpush2.bf16.msra.mxu0 0
        %821 = vmatprep.subr.bf16.mxu0 0
        %822 = vmatpush2.bf16.msra.mxu0 0
        %823 = vmatprep.subr.bf16.mxu0 0
        %824 = vmatpush2.bf16.msra.mxu0 0
        %825 = vmatprep.subr.bf16.mxu0 0
        %826 = vmatpush2.bf16.msra.mxu0 0
        %827 = vmatprep.subr.bf16.mxu0 0
        %828 = vmatpush2.bf16.msra.mxu0 0
        %829 = vmatprep.subr.bf16.mxu0 0
        %830 = vmatpush2.bf16.msra.mxu0 0
        %831 = vmatprep.subr.bf16.mxu0 0
        %832 = vmatpush2.bf16.msra.mxu0 0
        %833 = vmatprep.subr.bf16.mxu0 0
        %834 = vmatpush2.bf16.msra.mxu0 0
        %835 = vmatprep.mubr.bf16.mxu0 0
        %836 = vmatmul.mubr.bf16.gmra.mxu0 %v801
        %v837 = vpop.f32.mrf.mxu0
        %v838 = vadd.f32 0.0, %v837
        %v839 = vpop.f32.mrf.mxu0
        %v840 = vpop.f32.mrf.mxu0
        %v841 = vpop.f32.mrf.mxu0
        %842 = vdwg.mxu0
        %v843 = vsel %vm530, %v838, -1e+30
        %v844 = vld [vmem:[%s439] sm:$0xf]
        %v845 = vld [vmem:[%s439 + $0x4] sm:$0xf]
        %v846 = vld [vmem:[%s439 + $0x8] sm:$0xf]
        %v847 = vld [vmem:[%s439 + $0xc] sm:$0xf]
        %v848 = vld [vmem:[%s439 + $0x10] sm:$0xf]
        %v849 = vld [vmem:[%s439 + $0x14] sm:$0xf]
        %v850 = vld [vmem:[%s439 + $0x18] sm:$0xf]
        %v851 = vld [vmem:[%s439 + $0x1c] sm:$0xf]
        %v852 = vld [vmem:[%s439 + $0x20] sm:$0xf]
        %v853 = vld [vmem:[%s439 + $0x24] sm:$0xf]
        %v854 = vld [vmem:[%s439 + $0x28] sm:$0xf]
        %v855 = vld [vmem:[%s439 + $0x2c] sm:$0xf]
        %v856 = vld [vmem:[%s439 + $0x30] sm:$0xf]
        %v857 = vld [vmem:[%s439 + $0x34] sm:$0xf]
        %v858 = vld [vmem:[%s439 + $0x38] sm:$0xf]
        %v859 = vld [vmem:[%s439 + $0x3c] sm:$0xf]
        %v876 = vunpack.c.l.b16 %v844
        %v877 = vunpack.c.l.b16 %v845
        %v878 = vunpack.c.l.b16 %v846
        %v879 = vunpack.c.l.b16 %v847
        %v880 = vunpack.c.l.b16 %v848
        %v881 = vunpack.c.l.b16 %v849
        %v882 = vunpack.c.l.b16 %v850
        %v883 = vunpack.c.l.b16 %v851
        %v884 = vunpack.c.l.b16 %v852
        %v885 = vunpack.c.l.b16 %v853
        %v886 = vunpack.c.l.b16 %v854
        %v887 = vunpack.c.l.b16 %v855
        %v888 = vunpack.c.l.b16 %v856
        %v889 = vunpack.c.l.b16 %v857
        %v890 = vunpack.c.l.b16 %v858
        %v891 = vunpack.c.l.b16 %v859
        %v892 = vpack.c.b16 %v877, %v876
        %v893 = vpack.c.b16 %v879, %v878
        %v894 = vpack.c.b16 %v881, %v880
        %v895 = vpack.c.b16 %v883, %v882
        %v896 = vpack.c.b16 %v885, %v884
        %v897 = vpack.c.b16 %v887, %v886
        %v898 = vpack.c.b16 %v889, %v888
        %v899 = vpack.c.b16 %v891, %v890
        %908 = vmatprep.subr.bf16.mxu0 0
        %909 = vmatpush1.bf16.msra.mxu0 %v899
        %910 = vmatprep.subr.bf16.mxu0 0
        %911 = vmatpush1.bf16.msra.mxu0 %v898
        %912 = vmatprep.subr.bf16.mxu0 0
        %913 = vmatpush1.bf16.msra.mxu0 %v897
        %914 = vmatprep.subr.bf16.mxu0 0
        %915 = vmatpush1.bf16.msra.mxu0 %v896
        %916 = vmatprep.subr.bf16.mxu0 0
        %917 = vmatpush1.bf16.msra.mxu0 %v895
        %918 = vmatprep.subr.bf16.mxu0 0
        %919 = vmatpush1.bf16.msra.mxu0 %v894
        %920 = vmatprep.subr.bf16.mxu0 0
        %921 = vmatpush1.bf16.msra.mxu0 %v893
        %922 = vmatprep.subr.bf16.mxu0 0
        %923 = vmatpush1.bf16.msra.mxu0 %v892
        %924 = vmatprep.subr.bf16.mxu0 0
        %925 = vmatpush2.bf16.msra.mxu0 0
        %926 = vmatprep.subr.bf16.mxu0 0
        %927 = vmatpush2.bf16.msra.mxu0 0
        %928 = vmatprep.subr.bf16.mxu0 0
        %929 = vmatpush2.bf16.msra.mxu0 0
        %930 = vmatprep.subr.bf16.mxu0 0
        %931 = vmatpush2.bf16.msra.mxu0 0
        %932 = vmatprep.subr.bf16.mxu0 0
        %933 = vmatpush2.bf16.msra.mxu0 0
        %934 = vmatprep.subr.bf16.mxu0 0
        %935 = vmatpush2.bf16.msra.mxu0 0
        %936 = vmatprep.subr.bf16.mxu0 0
        %937 = vmatpush2.bf16.msra.mxu0 0
        %938 = vmatprep.subr.bf16.mxu0 0
        %939 = vmatpush2.bf16.msra.mxu0 0
        %940 = vmatprep.mubr.bf16.mxu0 0
        %941 = vmatmul.mubr.bf16.gmra.mxu0 %v668
        %v942 = vpop.f32.mrf.mxu0
        %v943 = vadd.f32 1e-06, %v942
        %v944 = vpop.f32.mrf.mxu0
        %v945 = vpop.f32.mrf.mxu0
        %v946 = vpop.f32.mrf.mxu0
        %947 = vdwg.mxu0
        %v948 = vlog2.pop %v943
        %v949 = vmul.f32 %v948, 0.6931472
        %vm950 = vcmp.gt.f32.partialorder %v537, 0.0
        %v951 = vsel %vm950, 0.999991, 9.9999e-07
        %v952 = vpack.c.bf16 %v951, %v951
        %v953 = vld [vmem:[%s448] sm:$0xf]
        %v954 = vld [vmem:[%s448 + $0x4] sm:$0xf]
        %v955 = vld [vmem:[%s448 + $0x8] sm:$0xf]
        %v956 = vld [vmem:[%s448 + $0xc] sm:$0xf]
        %v957 = vld [vmem:[%s448 + $0x10] sm:$0xf]
        %v958 = vld [vmem:[%s448 + $0x14] sm:$0xf]
        %v959 = vld [vmem:[%s448 + $0x18] sm:$0xf]
        %v960 = vld [vmem:[%s448 + $0x1c] sm:$0xf]
        %v961 = vld [vmem:[%s448 + $0x20] sm:$0xf]
        %v962 = vld [vmem:[%s448 + $0x24] sm:$0xf]
        %v963 = vld [vmem:[%s448 + $0x28] sm:$0xf]
        %v964 = vld [vmem:[%s448 + $0x2c] sm:$0xf]
        %v965 = vld [vmem:[%s448 + $0x30] sm:$0xf]
        %v966 = vld [vmem:[%s448 + $0x34] sm:$0xf]
        %v967 = vld [vmem:[%s448 + $0x38] sm:$0xf]
        %v968 = vld [vmem:[%s448 + $0x3c] sm:$0xf]
        %969 = vmax.xlane.f32.xlu0 %v843
        %v970 = vpop.xlane.xlu0 %969
        %v971 = vsub.f32 %v843, %v970
        %v972 = vmul.f32 %v971, 1.442695
        %v973 = vpow.pop %v972
        %974 = vadd.xlane.f32.xlu0 %v973
        %v975 = vpop.xlane.xlu0 %974
        %v976 = vrcp.pop %v975
        %v977 = vmul.f32 %v973, %v976
        %v978 = vlog2.pop %v975
        %v979 = vmul.f32 %v978, 0.6931472
        %v980 = vsub.f32 %v971, %v979
        %v981 = vpack.c.bf16 %v977, %v977
        %v982 = vld [vmem:[%s448] sm:$0xf]
        %v983 = vld [vmem:[%s448 + $0x4] sm:$0xf]
        %v984 = vld [vmem:[%s448 + $0x8] sm:$0xf]
        %v985 = vld [vmem:[%s448 + $0xc] sm:$0xf]
        %v986 = vld [vmem:[%s448 + $0x10] sm:$0xf]
        %v987 = vld [vmem:[%s448 + $0x14] sm:$0xf]
        %v988 = vld [vmem:[%s448 + $0x18] sm:$0xf]
        %v989 = vld [vmem:[%s448 + $0x1c] sm:$0xf]
        %v990 = vld [vmem:[%s448 + $0x20] sm:$0xf]
        %v991 = vld [vmem:[%s448 + $0x24] sm:$0xf]
        %v992 = vld [vmem:[%s448 + $0x28] sm:$0xf]
        %v993 = vld [vmem:[%s448 + $0x2c] sm:$0xf]
        %v994 = vld [vmem:[%s448 + $0x30] sm:$0xf]
        %v995 = vld [vmem:[%s448 + $0x34] sm:$0xf]
        %v996 = vld [vmem:[%s448 + $0x38] sm:$0xf]
        %v997 = vld [vmem:[%s448 + $0x3c] sm:$0xf]
        %v1014 = vunpack.c.l.b16 %v953
        %v1015 = vunpack.c.l.b16 %v954
        %v1016 = vunpack.c.l.b16 %v955
        %v1017 = vunpack.c.l.b16 %v956
        %v1018 = vunpack.c.l.b16 %v957
        %v1019 = vunpack.c.l.b16 %v958
        %v1020 = vunpack.c.l.b16 %v959
        %v1021 = vunpack.c.l.b16 %v960
        %v1022 = vunpack.c.l.b16 %v961
        %v1023 = vunpack.c.l.b16 %v962
        %v1024 = vunpack.c.l.b16 %v963
        %v1025 = vunpack.c.l.b16 %v964
        %v1026 = vunpack.c.l.b16 %v965
        %v1027 = vunpack.c.l.b16 %v966
        %v1028 = vunpack.c.l.b16 %v967
        %v1029 = vunpack.c.l.b16 %v968
        %v1030 = vpack.c.b16 %v1015, %v1014
        %v1031 = vpack.c.b16 %v1017, %v1016
        %v1032 = vpack.c.b16 %v1019, %v1018
        %v1033 = vpack.c.b16 %v1021, %v1020
        %v1034 = vpack.c.b16 %v1023, %v1022
        %v1035 = vpack.c.b16 %v1025, %v1024
        %v1036 = vpack.c.b16 %v1027, %v1026
        %v1037 = vpack.c.b16 %v1029, %v1028
        %1046 = vmatprep.subr.bf16.mxu0 0
        %1047 = vmatpush1.bf16.msra.mxu0 %v1037
        %1048 = vmatprep.subr.bf16.mxu0 0
        %1049 = vmatpush1.bf16.msra.mxu0 %v1036
        %1050 = vmatprep.subr.bf16.mxu0 0
        %1051 = vmatpush1.bf16.msra.mxu0 %v1035
        %1052 = vmatprep.subr.bf16.mxu0 0
        %1053 = vmatpush1.bf16.msra.mxu0 %v1034
        %1054 = vmatprep.subr.bf16.mxu0 0
        %1055 = vmatpush1.bf16.msra.mxu0 %v1033
        %1056 = vmatprep.subr.bf16.mxu0 0
        %1057 = vmatpush1.bf16.msra.mxu0 %v1032
        %1058 = vmatprep.subr.bf16.mxu0 0
        %1059 = vmatpush1.bf16.msra.mxu0 %v1031
        %1060 = vmatprep.subr.bf16.mxu0 0
        %1061 = vmatpush1.bf16.msra.mxu0 %v1030
        %1062 = vmatprep.subr.bf16.mxu0 0
        %1063 = vmatpush2.bf16.msra.mxu0 0
        %1064 = vmatprep.subr.bf16.mxu0 0
        %1065 = vmatpush2.bf16.msra.mxu0 0
        %1066 = vmatprep.subr.bf16.mxu0 0
        %1067 = vmatpush2.bf16.msra.mxu0 0
        %1068 = vmatprep.subr.bf16.mxu0 0
        %1069 = vmatpush2.bf16.msra.mxu0 0
        %1070 = vmatprep.subr.bf16.mxu0 0
        %1071 = vmatpush2.bf16.msra.mxu0 0
        %1072 = vmatprep.subr.bf16.mxu0 0
        %1073 = vmatpush2.bf16.msra.mxu0 0
        %1074 = vmatprep.subr.bf16.mxu0 0
        %1075 = vmatpush2.bf16.msra.mxu0 0
        %1076 = vmatprep.subr.bf16.mxu0 0
        %1077 = vmatpush2.bf16.msra.mxu0 0
        %1078 = vmatprep.mubr.bf16.mxu0 0
        %1079 = vmatmul.mubr.bf16.gmra.mxu0 %v952
        %v1080 = vpop.f32.mrf.mxu0
        %v1081 = vadd.f32 1e-06, %v1080
        %v1082 = vpop.f32.mrf.mxu0
        %v1083 = vpop.f32.mrf.mxu0
        %v1084 = vpop.f32.mrf.mxu0
        %1085 = vdwg.mxu0
        %v1086 = vlog2.pop %v1081
        %v1087 = vmul.f32 %v1086, 0.6931472
        %v1088 = vadd.f32 %v949, %v1087
        %v1105 = vunpack.c.l.b16 %v982
        %v1106 = vunpack.c.l.b16 %v983
        %v1107 = vunpack.c.l.b16 %v984
        %v1108 = vunpack.c.l.b16 %v985
        %v1109 = vunpack.c.l.b16 %v986
        %v1110 = vunpack.c.l.b16 %v987
        %v1111 = vunpack.c.l.b16 %v988
        %v1112 = vunpack.c.l.b16 %v989
        %v1113 = vunpack.c.l.b16 %v990
        %v1114 = vunpack.c.l.b16 %v991
        %v1115 = vunpack.c.l.b16 %v992
        %v1116 = vunpack.c.l.b16 %v993
        %v1117 = vunpack.c.l.b16 %v994
        %v1118 = vunpack.c.l.b16 %v995
        %v1119 = vunpack.c.l.b16 %v996
        %v1120 = vunpack.c.l.b16 %v997
        %v1121 = vpack.c.b16 %v1106, %v1105
        %v1122 = vpack.c.b16 %v1108, %v1107
        %v1123 = vpack.c.b16 %v1110, %v1109
        %v1124 = vpack.c.b16 %v1112, %v1111
        %v1125 = vpack.c.b16 %v1114, %v1113
        %v1126 = vpack.c.b16 %v1116, %v1115
        %v1127 = vpack.c.b16 %v1118, %v1117
        %v1128 = vpack.c.b16 %v1120, %v1119
        %1137 = vmatprep.subr.bf16.mxu0 0
        %1138 = vmatpush1.bf16.msra.mxu0 %v1128
        %1139 = vmatprep.subr.bf16.mxu0 0
        %1140 = vmatpush1.bf16.msra.mxu0 %v1127
        %1141 = vmatprep.subr.bf16.mxu0 0
        %1142 = vmatpush1.bf16.msra.mxu0 %v1126
        %1143 = vmatprep.subr.bf16.mxu0 0
        %1144 = vmatpush1.bf16.msra.mxu0 %v1125
        %1145 = vmatprep.subr.bf16.mxu0 0
        %1146 = vmatpush1.bf16.msra.mxu0 %v1124
        %1147 = vmatprep.subr.bf16.mxu0 0
        %1148 = vmatpush1.bf16.msra.mxu0 %v1123
        %1149 = vmatprep.subr.bf16.mxu0 0
        %1150 = vmatpush1.bf16.msra.mxu0 %v1122
        %1151 = vmatprep.subr.bf16.mxu0 0
        %1152 = vmatpush1.bf16.msra.mxu0 %v1121
        %1153 = vmatprep.subr.bf16.mxu0 0
        %1154 = vmatpush2.bf16.msra.mxu0 0
        %1155 = vmatprep.subr.bf16.mxu0 0
        %1156 = vmatpush2.bf16.msra.mxu0 0
        %1157 = vmatprep.subr.bf16.mxu0 0
        %1158 = vmatpush2.bf16.msra.mxu0 0
        %1159 = vmatprep.subr.bf16.mxu0 0
        %1160 = vmatpush2.bf16.msra.mxu0 0
        %1161 = vmatprep.subr.bf16.mxu0 0
        %1162 = vmatpush2.bf16.msra.mxu0 0
        %1163 = vmatprep.subr.bf16.mxu0 0
        %1164 = vmatpush2.bf16.msra.mxu0 0
        %1165 = vmatprep.subr.bf16.mxu0 0
        %1166 = vmatpush2.bf16.msra.mxu0 0
        %1167 = vmatprep.subr.bf16.mxu0 0
        %1168 = vmatpush2.bf16.msra.mxu0 0
        %1169 = vmatprep.mubr.bf16.mxu0 0
        %1170 = vmatmul.mubr.bf16.gmra.mxu0 %v981
        %v1171 = vpop.f32.mrf.mxu0
        %v1172 = vadd.f32 1e-06, %v1171
        %v1173 = vpop.f32.mrf.mxu0
        %v1174 = vpop.f32.mrf.mxu0
        %v1175 = vpop.f32.mrf.mxu0
        %1176 = vdwg.mxu0
        %v1177 = vlog2.pop %v1172
        %v1178 = vmul.f32 %v1177, 0.6931472
        %v1179 = vadd.f32 %v949, %v1178
        %v1180 = vsel %vm950, 9.999995e-07, -13.815511
        %v1181 = vld [vmem:[%s526] sm:$0x1]
        %vm1182 = vcmp.gt.f32.partialorder %v1181, 0.0
        %v1183 = vsel %vm1182, 1, 0
        %v1184 = vlaneseq
        %v1185 = vshrl.u32 %v1184, 7
        %v1186 = vsub.s32 0, %v1185
        %v1187 = vrot.slane %v1183, %v1186
        %1188 = vset.pattern.permute.xlu0 0
        %1189 = vperm.xlu0 %1188, %v1187
        %v1190 = vpop.permute.xlu0 %1189
        %vm1191 = vcmp.eq.s32.totalorder %v1190, 1
        %v1192 = vsel %vm1191, %v1180, %v1088
        %v1193 = vsel %vm530, %v1192, -1e+30
        %v1194 = vsel %vm1191, %v843, %v1179
        %v1195 = vsel %vm530, %v1194, -1e+30
        %1196 = vmax.xlane.f32.xlu0 %v1193
        %v1197 = vpop.xlane.xlu0 %1196
        %v1198 = vsub.f32 %v1193, %v1197
        %v1199 = vmul.f32 %v1198, 1.442695
        %v1200 = vpow.pop %v1199
        %1201 = vadd.xlane.f32.xlu0 %v1200
        %v1202 = vpop.xlane.xlu0 %1201
        %v1203 = vrcp.pop %v1202
        %v1204 = vmul.f32 %v1200, %v1203
        %v1205 = vlog2.pop %v1202
        %v1206 = vmul.f32 %v1205, 0.6931472
        %v1207 = vsub.f32 %v1198, %v1206
        %1208 = vmax.xlane.f32.xlu0 %v1195
        %v1209 = vpop.xlane.xlu0 %1208
        %v1210 = vsub.f32 %v1195, %v1209
        %v1211 = vmul.f32 %v1210, 1.442695
        %v1212 = vpow.pop %v1211
        %1213 = vadd.xlane.f32.xlu0 %v1212
        %v1214 = vpop.xlane.xlu0 %1213
        %v1215 = vlog2.pop %v1214
        %v1216 = vmul.f32 %v1215, 0.6931472
        %v1217 = vsub.f32 %v1210, %v1216
        %v1218 = vsub.f32 %v1207, %v1217
        %v1219 = vmul.f32 %v1204, %v1218
        %v1220 = vmul.f32 %v537, %v980
        %v1221 = vsub.f32 0.0, %v1220
        %1222 = vadd.xlane.f32.xlu0 %v1219
        %v1223 = vpop.xlane.xlu0 %1222
        %v1224 = vrot.slane %v1223, 4
        %v1225 = vadd.f32 %v1223, %v1224
        %v1226 = vrot.slane %v1225, 2
        %v1227 = vadd.f32 %v1225, %v1226
        %v1228 = vrot.slane %v1227, 1
        %v1229 = vadd.f32 %v1227, %v1228
        %1230 = vadd.xlane.f32.xlu0 %v1221
        %v1231 = vpop.xlane.xlu0 %1230
        %v1232 = vrot.slane %v1231, 4
        %v1233 = vadd.f32 %v1231, %v1232
        %v1234 = vrot.slane %v1233, 2
        %v1235 = vadd.f32 %v1233, %v1234
        %v1236 = vrot.slane %v1235, 1
        %v1237 = vadd.f32 %v1235, %v1236
        %vm1238 = vcmp.eq.s32.totalorder %v529, 10
        %v1239 = vcvt.s32.f32 %v664
        %v1240 = vsel %vm1238, %v1239, %v838
        %1241 = vst [vmem:[%s506] sm:$0xff] %v1240
        %vm1242 = vcmp.eq.s32.totalorder %v529, 0
        %vm1243 = vcmp.eq.s32.totalorder %v529, 1
        %v1244 = vsel %vm1243, %v1237, 0.0
        %v1245 = vsel %vm1242, %v1229, %v1244
        %1246 = vst [vmem:[%s512] sm:$0x1] %v1245
        %s1247 = sand.u32 %s266, 1
        %s1248 = scalar_lea.sflag [#allocation4], %s1247
        %s1249 = sand.u32 %s266, 1
        %s1250 = smul.addr %s1249, 8
        %s1251 = scalar_lea.vmem [#allocation8], %s1250
        %s1252 = sand.u32 %s292, 1
        %s1253 = scalar_lea.sflag [#allocation10], %s1252
        %s1254 = sand.u32 %s292, 1
        %s1255 = scalar_lea.vmem [#allocation9], %s1254
        // Predicated region
        $region69: #{tpu_custom_call.1} parent=55 // pred_check
          %p1256 = pneg %p276
        $region70: #{tpu_custom_call.1} parent=55 // pred_check_branch
          %1258 = sbr.rel (%p1256) target = $region72
        $region71: #{tpu_custom_call.1} parent=55 // pred_region
          %s1260 = ssub.s32 128, 128
          %1261 = vsyncadd %s1248, %s1260
          %s1262 = smul.addr %s34, 128
          %s1263 = scalar_lea.hbm %s9, %s1262
          %s1265 = sshll.u32 %s1251, 4
          %s1266 = int_to_ptr.vmem [resolvable:$true] %s1265
          %1268 = dma.vmem_to_hbm [thread:$0]  %s1266, 128, %s1263, %s1248
        $region72: #{tpu_custom_call.1} parent=55 // pred_fallthru
          _
        // Predicated region
        $region73: #{tpu_custom_call.1} parent=55 // pred_check
          %p1269 = pneg %p302
        $region74: #{tpu_custom_call.1} parent=55 // pred_check_branch
          %1271 = sbr.rel (%p1269) target = $region76
        $region75: #{tpu_custom_call.1} parent=55 // pred_region
          %s1273 = ssub.s32 16, 16
          %1274 = vsyncadd %s1253, %s1273
          %s1275 = smul.addr %s34, 16
          %s1276 = scalar_lea.hbm %s10, %s1275
          %s1278 = sshll.u32 %s1255, 4
          %s1279 = int_to_ptr.vmem [resolvable:$true] %s1278
          %1281 = dma.vmem_to_hbm [thread:$0]  %s1279, 16, %s1276, %s1253
        $region76: #{tpu_custom_call.1} parent=55 // pred_fallthru
          _
      $region56: #{tpu_custom_call.1} parent=5 // pred_fallthru
        _
      %p1282 = scmp.le.s32.totalorder 2, %s29
      // Predicated region
      $region77: #{tpu_custom_call.1} parent=5 // pred_check
        %p1283 = pneg %p1282
      $region78: #{tpu_custom_call.1} parent=5 // pred_check_branch
        %1285 = sbr.rel (%p1283) target = $region80
      $region79: #{tpu_custom_call.1} parent=5 // pred_region
        %s1286 = ssub.s32 %s29, 2
        // Predicated region
        $region81: #{tpu_custom_call.1} parent=79 // pred_check
          %p1287 = pneg %p282
        $region82: #{tpu_custom_call.1} parent=79 // pred_check_branch
          %1289 = sbr.rel (%p1287) target = $region84
        $region83: #{tpu_custom_call.1} parent=79 // pred_region
          %s1290 = sand.u32 %s267, 1
          %s1291 = scalar_lea.sflag [#allocation4], %s1290
          %s1292 = sand.u32 %s267, 1
          %s1293 = smul.addr %s1292, 8
          %s1294 = scalar_lea.vmem [#allocation8], %s1293
          %1295 = dma.done %s1291, 128
        $region84: #{tpu_custom_call.1} parent=79 // pred_fallthru
          _
        // Predicated region
        $region85: #{tpu_custom_call.1} parent=79 // pred_check
          %p1296 = pneg %p308
        $region86: #{tpu_custom_call.1} parent=79 // pred_check_branch
          %1298 = sbr.rel (%p1296) target = $region88
        $region87: #{tpu_custom_call.1} parent=79 // pred_region
          %s1299 = sand.u32 %s293, 1
          %s1300 = scalar_lea.sflag [#allocation10], %s1299
          %s1301 = sand.u32 %s293, 1
          %s1302 = scalar_lea.vmem [#allocation9], %s1301
          %1303 = dma.done %s1300, 16
        $region88: #{tpu_custom_call.1} parent=79 // pred_fallthru
          _
      $region80: #{tpu_custom_call.1} parent=5 // pred_fallthru
        _
    $region6: #{tpu_custom_call.1} parent=1 // loop_footer
      %s33 = sadd.s32 1, %s29
    $region7: #{tpu_custom_call.1} parent=1 // loop_footer_branch
      %28 = sbr.rel target = $region3
    $region8: #{tpu_custom_call.1} parent=1 // loop_exit
      _
    %1304 = vsyncpa [#allocation3], 1
    %s1305 = scalar_lea.sflag [#allocation3], 1
    %1306 = vsyncpa %s1305, 1
    %1307 = vsyncpa [#allocation6], 1
    %s1308 = scalar_lea.sflag [#allocation6], 1
    %1309 = vsyncpa %s1308, 1
    %1310 = vsyncpa [#allocation4], 1
    %s1311 = scalar_lea.sflag [#allocation4], 1
    %1312 = vsyncpa %s1311, 1
    %1313 = vsyncpa [#allocation10], 1
    %s1314 = scalar_lea.sflag [#allocation10], 1
    %1315 = vsyncpa %s1314, 1

</llo_original>
